<compile_context>
chip_gen: v6e
topology: v6e:2x2x1
jax: 0.10.0
libtpu: 0.0.40
codegen_flags: <defaults>
</compile_context>

<pallas_src>
import jax
import jax.numpy as jnp
from jax.experimental import pallas as pl
from jax.experimental.pallas import tpu as pltpu

IN_FEATURES = 121      # 1 * 11 * 11 (input and output feature count)


def _round_up(x, m):
    return (x + m - 1) // m * m


# ---------------------------------------------------------------------------
# Pallas kernel factory: the entire forward pass, fully VMEM-resident.
# `plan` is a static tuple of (row_off, col_off, Kpad, Npad, relu) per layer,
# indexing into the packed weight slab.  All offsets/sizes are multiples of
# 128 (lanes) / 8 (sublanes) -> static tile-aligned slices are free views.
# ---------------------------------------------------------------------------
def _make_kernel(plan):
    n_layers = len(plan)

    def kernel(x_ref, w_ref, b_ref, o_ref):
        # x_ref: (TB, Kpad0) bf16    w_ref: (SLAB_R, SLAB_W) bf16
        # b_ref: (16, SLAB_W) f32    o_ref: (TB, Npad_last) f32
        h = x_ref[...]                                   # bf16 activations
        out = None
        for l, (ro, co, kp, npd, relu) in enumerate(plan):   # static unroll
            w_l = w_ref[ro:ro + kp, co:co + npd]         # free aligned view
            acc = jnp.dot(h, w_l, preferred_element_type=jnp.float32)
            acc = acc + b_ref[l:l + 1, :npd]             # (1, Npad) broadcast
            if relu:
                acc = jnp.maximum(acc, 0.0)
            if l + 1 < n_layers:
                h = acc.astype(jnp.bfloat16)             # Npad_l == Kpad_{l+1}
            else:
                out = acc
        o_ref[...] = out                                 # lane-dense 128-wide slab

    return kernel


def _pick_tile(n):
    # Aim for >= 2 grid steps (v7x megacore sharding), 16-row (bf16 sublane)
    # granularity, cap at 512 to amortize the ~0.35us per-step pipeline cost.
    half = -(-n // 2)
    tb = _round_up(max(half, 1), 16)
    return max(16, min(512, tb))


def build_forward(plan):
    kernel = _make_kernel(plan)
    kp0 = plan[0][2]          # padded input width (128)
    d_out = plan[-1][3]       # padded output width (128)

    @jax.jit
    def forward(x_nchw, w_bf16, b_f32):
        """x_nchw: (N, 1, 11, 11) f32 -> (N, 1, 11, 11) f32."""
        N = x_nchw.shape[0]
        x_flat = x_nchw.reshape(N, IN_FEATURES).astype(jnp.bfloat16)
        tb = _pick_tile(N)
        npad = _round_up(N, tb)
        x_pad = jnp.zeros((npad, kp0), jnp.bfloat16).at[:N, :IN_FEATURES].set(x_flat)
        grid = npad // tb
        out = pl.pallas_call(
            kernel,
            out_shape=jax.ShapeDtypeStruct((npad, d_out), jnp.float32),
            grid=(grid,),
            in_specs=[
                pl.BlockSpec((tb, kp0), lambda i: (i, 0)),          # batch row tile
                pl.BlockSpec(w_bf16.shape, lambda i: (0, 0)),       # packed weights, resident
                pl.BlockSpec(b_f32.shape, lambda i: (0, 0)),        # biases, resident
            ],
            out_specs=pl.BlockSpec((tb, d_out), lambda i: (i, 0)),
            compiler_params=pltpu.CompilerParams(
                dimension_semantics=("parallel",)),                 # megacore over batch tiles
        )(x_pad, w_bf16, b_f32)
        return out[:N, :IN_FEATURES].reshape(N, 1, 11, 11)

    return forward


# ---------------------------------------------------------------------------
# One-time parameter preparation (NOT in the per-forward hot path):
#   - lower conv / conv-transpose layers to dense (in, out) matrices,
#   - fold the two ReLU-free junctions (11 layers -> 9),
#   - skyline-pack the 128-padded blocks into one dense lane-aligned slab.
# ---------------------------------------------------------------------------
def _torch_conv2d(x, w, stride, pad):
    # x: (B, C, H, W), w: (OC, IC, K, K) -- PyTorch Conv2d semantics
    return jax.lax.conv_general_dilated(
        x, w, window_strides=(stride, stride),
        padding=[(pad, pad), (pad, pad)],
        dimension_numbers=("NCHW", "OIHW", "NCHW"))


def _torch_conv_transpose2d(x, w, stride, pad):
    # x: (B, C, H, W), w: (IC, OC, K, K) -- PyTorch ConvTranspose2d semantics
    K = w.shape[2]
    w_flip = jnp.transpose(jnp.flip(w, axis=(2, 3)), (1, 0, 2, 3))   # -> (OC, IC, K, K)
    return jax.lax.conv_general_dilated(
        x, w_flip, window_strides=(1, 1),
        padding=[(K - 1 - pad, K - 1 - pad)] * 2,
        lhs_dilation=(stride, stride),
        dimension_numbers=("NCHW", "OIHW", "NCHW"))


def _layer_to_matrix(apply_fn, bias, in_shape):
    """Lower a linear spatial op acting on NCHW-flattened vectors to a dense
    (in_features, out_features) matrix + flattened bias."""
    C, H, W = in_shape
    n = C * H * W
    basis = jnp.eye(n, dtype=jnp.float32).reshape(n, C, H, W)
    out = apply_fn(basis)                                  # (n, OC, Ho, Wo)
    oc, ho, wo = out.shape[1], out.shape[2], out.shape[3]
    mat = out.reshape(n, oc * ho * wo)
    bflat = jnp.broadcast_to(bias[:, None, None], (oc, ho, wo)).reshape(-1)
    return mat, bflat


def prepare_fused_params(p):
    """Returns (W_slab_f32, B_slab_f32, plan) with plan = tuple of
    (row_off, col_off, Kpad, Npad, relu) per fused layer."""
    c1 = _layer_to_matrix(lambda x: _torch_conv2d(x, p["e_conv1_w"], 2, 1),
                          p["e_conv1_b"], (1, 11, 11))                      # 121 -> 288
    c2 = _layer_to_matrix(lambda x: _torch_conv2d(x, p["e_conv2_w"], 2, 1),
                          p["e_conv2_b"], (8, 6, 6))                        # 288 -> 144
    c3 = _layer_to_matrix(lambda x: _torch_conv2d(x, p["e_conv3_w"], 2, 0),
                          p["e_conv3_b"], (16, 3, 3))                       # 144 -> 32
    t1 = _layer_to_matrix(lambda x: _torch_conv_transpose2d(x, p["d_dconv1_w"], 2, 0),
                          p["d_dconv1_b"], (32, 1, 1))                      # 32  -> 144
    t2 = _layer_to_matrix(lambda x: _torch_conv_transpose2d(x, p["d_dconv2_w"], 2, 1),
                          p["d_dconv2_b"], (16, 3, 3))                      # 144 -> 200
    t3 = _layer_to_matrix(lambda x: _torch_conv_transpose2d(x, p["d_dconv3_w"], 2, 0),
                          p["d_dconv3_b"], (8, 5, 5))                       # 200 -> 121

    # Fold enc_lin2 (no ReLU) into dec_lin1, and dconv3 (no ReLU) into linear_output.
    m4, b4 = p["e_lin2_w"].T, p["e_lin2_b"]        # (F,E), (E,)
    m5, b5 = p["d_lin1_w"].T, p["d_lin1_b"]        # (E,F), (F,)
    m45, b45 = m4 @ m5, b4 @ m5 + b5               # F -> F
    m9, b9 = t3                                     # (200,121), (121,)
    m10 = p["out_w"].T                              # (121,121), no bias
    m910, b910 = m9 @ m10, b9 @ m10                 # 200 -> 121

    layers = [
        (c1[0], c1[1], True),                       # conv1            121 -> 288
        (c2[0], c2[1], True),                       # conv2            288 -> 144
        (c3[0], c3[1], True),                       # conv3            144 -> 32
        (p["e_lin1_w"].T, p["e_lin1_b"], True),     # enc_lin1          32 -> F
        (m45, b45, True),                           # enc_lin2∘dec_lin1  F -> F
        (p["d_lin2_w"].T, p["d_lin2_b"], True),     # dec_lin2           F -> 32
        (t1[0], t1[1], True),                       # dconv1            32 -> 144
        (t2[0], t2[1], True),                       # dconv2           144 -> 200
        (m910, b910, False),                        # dconv3∘lin_out   200 -> 121
    ]

    pads = [(_round_up(m.shape[0], 128), _round_up(m.shape[1], 128)) for m, _, _ in layers]
    assert pads[0][0] == _round_up(IN_FEATURES, 128)
    for l in range(1, len(pads)):
        assert pads[l][0] == pads[l - 1][1], (l, pads)   # chain width consistency

    # Greedy skyline packing of (Kpad, Npad) blocks into a width-SLAB_W slab.
    slab_w = max(npd for _, npd in pads)
    n_strips = slab_w // 128
    heights = [0] * n_strips
    plan = []
    for (kp, npd), (_, _, relu) in zip(pads, layers):
        c = npd // 128
        best_s, best_row = 0, None
        for s in range(n_strips - c + 1):
            row = max(heights[s:s + c])
            if best_row is None or row < best_row:
                best_s, best_row = s, row
        for s in range(best_s, best_s + c):
            heights[s] = best_row + kp
        plan.append((best_row, best_s * 128, kp, npd, relu))
    slab_rows = _round_up(max(heights), 8)

    W = jnp.zeros((slab_rows, slab_w), jnp.float32)
    B = jnp.zeros((_round_up(len(layers), 8), slab_w), jnp.float32)
    for l, ((m, b, _), (ro, co, _, _, _)) in enumerate(zip(layers, plan)):
        ki, ko = m.shape
        W = W.at[ro:ro + ki, co:co + ko].set(m.astype(jnp.float32))
        B = B.at[l, :ko].set(b.astype(jnp.float32))
    return W, B, tuple(plan)


# ---------------------------------------------------------------------------
# References for validation
# ---------------------------------------------------------------------------
def _relu(x):
    return jnp.maximum(x, 0.0)


def _direct_forward(x, p):
    """f32 layer-by-layer forward with real lax convs (mirrors the nn.Module)."""
    N = x.shape[0]
    h = _relu(_torch_conv2d(x, p["e_conv1_w"], 2, 1) + p["e_conv1_b"][None, :, None, None])
    h = _relu(_torch_conv2d(h, p["e_conv2_w"], 2, 1) + p["e_conv2_b"][None, :, None, None])
    h = _relu(_torch_conv2d(h, p["e_conv3_w"], 2, 0) + p["e_conv3_b"][None, :, None, None])
    h = h.reshape(N, -1)
    h = _relu(h @ p["e_lin1_w"].T + p["e_lin1_b"])
    h = h @ p["e_lin2_w"].T + p["e_lin2_b"]
    h = _relu(h @ p["d_lin1_w"].T + p["d_lin1_b"])
    h = _relu(h @ p["d_lin2_w"].T + p["d_lin2_b"])
    h = h.reshape(N, 32, 1, 1)
    h = _relu(_torch_conv_transpose2d(h, p["d_dconv1_w"], 2, 0) + p["d_dconv1_b"][None, :, None, None])
    h = _relu(_torch_conv_transpose2d(h, p["d_dconv2_w"], 2, 1) + p["d_dconv2_b"][None, :, None, None])
    h = _torch_conv_transpose2d(h, p["d_dconv3_w"], 2, 0) + p["d_dconv3_b"][None, :, None, None]
    h = h.reshape(N, IN_FEATURES) @ p["out_w"].T
    return h.reshape(N, 1, 11, 11)


def _reference_matmul_forward(x_nchw, w_f32, b_f32, plan):
    """f32 plain-JAX evaluation of the packed/folded matmul chain."""
    N = x_nchw.shape[0]
    h = jnp.zeros((N, plan[0][2]), jnp.float32).at[:, :IN_FEATURES].set(
        x_nchw.reshape(N, IN_FEATURES))
    for l, (ro, co, kp, npd, relu) in enumerate(plan):
        h = h @ w_f32[ro:ro + kp, co:co + npd] + b_f32[l, :npd]
        if relu:
            h = jnp.maximum(h, 0.0)
    return h[:, :IN_FEATURES].reshape(N, 1, 11, 11)


# ---------------------------------------------------------------------------
# Deterministic parameter initialization (shapes from the nn.Module __init__)
# ---------------------------------------------------------------------------
def init_params(key, encoded_space_dim, fc2_input_dim):
    keys = jax.random.split(key, 20)
    nrm = lambda k, shape: 0.1 * jax.random.normal(k, shape, jnp.float32)
    E, F = encoded_space_dim, fc2_input_dim
    return {
        # Encoder
        "e_conv1_w": nrm(keys[0], (8, 1, 3, 3)),   "e_conv1_b": nrm(keys[1], (8,)),
        "e_conv2_w": nrm(keys[2], (16, 8, 3, 3)),  "e_conv2_b": nrm(keys[3], (16,)),
        "e_conv3_w": nrm(keys[4], (32, 16, 3, 3)), "e_conv3_b": nrm(keys[5], (32,)),
        "e_lin1_w": nrm(keys[6], (F, 32)),         "e_lin1_b": nrm(keys[7], (F,)),
        "e_lin2_w": nrm(keys[8], (E, F)),          "e_lin2_b": nrm(keys[9], (E,)),
        # Decoder
        "d_lin1_w": nrm(keys[10], (F, E)),         "d_lin1_b": nrm(keys[11], (F,)),
        "d_lin2_w": nrm(keys[12], (32, F)),        "d_lin2_b": nrm(keys[13], (32,)),
        "d_dconv1_w": nrm(keys[14], (32, 16, 3, 3)), "d_dconv1_b": nrm(keys[15], (16,)),
        "d_dconv2_w": nrm(keys[16], (16, 8, 3, 3)),  "d_dconv2_b": nrm(keys[17], (8,)),
        "d_dconv3_w": nrm(keys[18], (8, 1, 3, 3)),   "d_dconv3_b": nrm(keys[19], (1,)),
        # linear_output (bias=False)
        "out_w": 0.1 * jax.random.normal(jax.random.fold_in(key, 99), (121, 121), jnp.float32),
    }


if __name__ == "__main__":
    key = jax.random.PRNGKey(0)
    k_x, k_p = jax.random.split(key)

    encoded_space_dim, fc2_input_dim, batch = 8, 32, 2
    params = init_params(k_p, encoded_space_dim, fc2_input_dim)

    # One-time prep: folded + densely packed matmul layouts, bf16 MXU operands.
    W_f32, B_f32, plan = prepare_fused_params(params)
    W_bf16 = W_f32.astype(jnp.bfloat16)
    forward = build_forward(plan)

    # Input must be (N, 1, 11, 11) so the encoder's flatten yields 32 features.
    x = jax.random.normal(k_x, (batch, 1, 11, 11), jnp.float32)

    y = jax.block_until_ready(forward(x, W_bf16, B_f32))
    assert y.shape == (batch, 1, 11, 11), y.shape
    assert bool(jnp.all(jnp.isfinite(y)))

    # Check 1: conv->matrix lowering + folding + packing is exact (f32 vs f32).
    y_direct = _direct_forward(x, params)
    y_mm = _reference_matmul_forward(x, W_f32, B_f32, plan)
    lower_err = float(jnp.max(jnp.abs(y_mm - y_direct)) / (jnp.max(jnp.abs(y_direct)) + 1e-6))
    assert lower_err < 1e-4, lower_err

    # Check 2: fused Pallas bf16 kernel vs the direct f32 chain.
    rel_err = float(jnp.max(jnp.abs(y - y_direct)) / (jnp.max(jnp.abs(y_direct)) + 1e-6))
    assert rel_err < 5e-2, rel_err

    print("KERNEL_OK")
</pallas_src>

<mosaic_0001>
module attributes {stable_mosaic.version = 11 : i64} {
  func.func @kernel(%arg0: i32, %arg1: memref<16x128xbf16, #tpu.memory_space<vmem>>, %arg2: memref<1024x384xbf16, #tpu.memory_space<vmem>>, %arg3: memref<16x384xf32, #tpu.memory_space<vmem>>, %arg4: memref<16x128xf32, #tpu.memory_space<vmem>>) attributes {dimension_semantics = [#tpu.dimension_semantics<parallel>], iteration_bounds = array<i64: 1>, scalar_prefetch = 0 : i64, scratch_operands = 0 : i64, tpu.core_type = #tpu.core_type<tc>, window_params = [{transform_indices = @transform_0, window_bounds = array<i64: 16, 128>}, {pipeline_mode = #tpu.pipeline_mode<synchronous>, transform_indices = @transform_1, window_bounds = array<i64: 1024, 384>}, {pipeline_mode = #tpu.pipeline_mode<synchronous>, transform_indices = @transform_2, window_bounds = array<i64: 16, 384>}, {transform_indices = @transform_3, window_bounds = array<i64: 16, 128>}]} {
    %c0 = arith.constant 0 : index
    %c0_0 = arith.constant 0 : index
    %0 = vector.load %arg1[%c0, %c0_0] : memref<16x128xbf16, #tpu.memory_space<vmem>>, vector<16x128xbf16>
    %c0_1 = arith.constant 0 : index
    %c0_2 = arith.constant 0 : index
    %1 = vector.load %arg2[%c0_1, %c0_2] : memref<1024x384xbf16, #tpu.memory_space<vmem>>, vector<128x384xbf16>
    %cst = arith.constant dense<0.000000e+00> : vector<16x384xf32>
    %2 = tpu.matmul %0, %1, %cst {dimension_numbers = #tpu.dot_dimension_numbers<[1], [0], [0], [1], [0, 0, 1, 1], [], []>} : vector<16x128xbf16>, vector<128x384xbf16>, vector<16x384xf32> -> vector<16x384xf32>
    %c0_3 = arith.constant 0 : index
    %c0_4 = arith.constant 0 : index
    %3 = vector.load %arg3[%c0_3, %c0_4] : memref<16x384xf32, #tpu.memory_space<vmem>>, vector<1x384xf32>
    %4 = vector.broadcast %3 : vector<1x384xf32> to vector<16x384xf32>
    %5 = arith.addf %2, %4 : vector<16x384xf32>
    %cst_5 = arith.constant 0.000000e+00 : f32
    %6 = vector.broadcast %cst_5 : f32 to vector<16x384xf32>
    %7 = arith.maximumf %5, %6 : vector<16x384xf32>
    %8 = arith.truncf %7 : vector<16x384xf32> to vector<16x384xbf16>
    %c128 = arith.constant 128 : index
    %c0_6 = arith.constant 0 : index
    %9 = vector.load %arg2[%c128, %c0_6] : memref<1024x384xbf16, #tpu.memory_space<vmem>>, vector<384x256xbf16>
    %cst_7 = arith.constant dense<0.000000e+00> : vector<16x256xf32>
    %10 = tpu.matmul %8, %9, %cst_7 {dimension_numbers = #tpu.dot_dimension_numbers<[1], [0], [0], [1], [0, 0, 1, 1], [], []>} : vector<16x384xbf16>, vector<384x256xbf16>, vector<16x256xf32> -> vector<16x256xf32>
    %c1 = arith.constant 1 : index
    %c0_8 = arith.constant 0 : index
    %11 = vector.load %arg3[%c1, %c0_8] : memref<16x384xf32, #tpu.memory_space<vmem>>, vector<1x256xf32>
    %12 = vector.broadcast %11 : vector<1x256xf32> to vector<16x256xf32>
    %13 = arith.addf %10, %12 : vector<16x256xf32>
    %cst_9 = arith.constant 0.000000e+00 : f32
    %14 = vector.broadcast %cst_9 : f32 to vector<16x256xf32>
    %15 = arith.maximumf %13, %14 : vector<16x256xf32>
    %16 = arith.truncf %15 : vector<16x256xf32> to vector<16x256xbf16>
    %c128_10 = arith.constant 128 : index
    %c256 = arith.constant 256 : index
    %17 = vector.load %arg2[%c128_10, %c256] : memref<1024x384xbf16, #tpu.memory_space<vmem>>, vector<256x128xbf16>
    %cst_11 = arith.constant dense<0.000000e+00> : vector<16x128xf32>
    %18 = tpu.matmul %16, %17, %cst_11 {dimension_numbers = #tpu.dot_dimension_numbers<[1], [0], [0], [1], [0, 0, 1, 1], [], []>} : vector<16x256xbf16>, vector<256x128xbf16>, vector<16x128xf32> -> vector<16x128xf32>
    %c2 = arith.constant 2 : index
    %c0_12 = arith.constant 0 : index
    %19 = vector.load %arg3[%c2, %c0_12] : memref<16x384xf32, #tpu.memory_space<vmem>>, vector<1x128xf32>
    %20 = vector.broadcast %19 : vector<1x128xf32> to vector<16x128xf32>
    %21 = arith.addf %18, %20 : vector<16x128xf32>
    %cst_13 = arith.constant 0.000000e+00 : f32
    %22 = vector.broadcast %cst_13 : f32 to vector<16x128xf32>
    %23 = arith.maximumf %21, %22 : vector<16x128xf32>
    %24 = arith.truncf %23 : vector<16x128xf32> to vector<16x128xbf16>
    %c384 = arith.constant 384 : index
    %c256_14 = arith.constant 256 : index
    %25 = vector.load %arg2[%c384, %c256_14] : memref<1024x384xbf16, #tpu.memory_space<vmem>>, vector<128x128xbf16>
    %cst_15 = arith.constant dense<0.000000e+00> : vector<16x128xf32>
    %26 = tpu.matmul %24, %25, %cst_15 {dimension_numbers = #tpu.dot_dimension_numbers<[1], [0], [0], [1], [0, 0, 1, 1], [], []>} : vector<16x128xbf16>, vector<128x128xbf16>, vector<16x128xf32> -> vector<16x128xf32>
    %c3 = arith.constant 3 : index
    %c0_16 = arith.constant 0 : index
    %27 = vector.load %arg3[%c3, %c0_16] : memref<16x384xf32, #tpu.memory_space<vmem>>, vector<1x128xf32>
    %28 = vector.broadcast %27 : vector<1x128xf32> to vector<16x128xf32>
    %29 = arith.addf %26, %28 : vector<16x128xf32>
    %cst_17 = arith.constant 0.000000e+00 : f32
    %30 = vector.broadcast %cst_17 : f32 to vector<16x128xf32>
    %31 = arith.maximumf %29, %30 : vector<16x128xf32>
    %32 = arith.truncf %31 : vector<16x128xf32> to vector<16x128xbf16>
    %c512 = arith.constant 512 : index
    %c0_18 = arith.constant 0 : index
    %33 = vector.load %arg2[%c512, %c0_18] : memref<1024x384xbf16, #tpu.memory_space<vmem>>, vector<128x128xbf16>
    %cst_19 = arith.constant dense<0.000000e+00> : vector<16x128xf32>
    %34 = tpu.matmul %32, %33, %cst_19 {dimension_numbers = #tpu.dot_dimension_numbers<[1], [0], [0], [1], [0, 0, 1, 1], [], []>} : vector<16x128xbf16>, vector<128x128xbf16>, vector<16x128xf32> -> vector<16x128xf32>
    %c4 = arith.constant 4 : index
    %c0_20 = arith.constant 0 : index
    %35 = vector.load %arg3[%c4, %c0_20] : memref<16x384xf32, #tpu.memory_space<vmem>>, vector<1x128xf32>
    %36 = vector.broadcast %35 : vector<1x128xf32> to vector<16x128xf32>
    %37 = arith.addf %34, %36 : vector<16x128xf32>
    %cst_21 = arith.constant 0.000000e+00 : f32
    %38 = vector.broadcast %cst_21 : f32 to vector<16x128xf32>
    %39 = arith.maximumf %37, %38 : vector<16x128xf32>
    %40 = arith.truncf %39 : vector<16x128xf32> to vector<16x128xbf16>
    %c512_22 = arith.constant 512 : index
    %c128_23 = arith.constant 128 : index
    %41 = vector.load %arg2[%c512_22, %c128_23] : memref<1024x384xbf16, #tpu.memory_space<vmem>>, vector<128x128xbf16>
    %cst_24 = arith.constant dense<0.000000e+00> : vector<16x128xf32>
    %42 = tpu.matmul %40, %41, %cst_24 {dimension_numbers = #tpu.dot_dimension_numbers<[1], [0], [0], [1], [0, 0, 1, 1], [], []>} : vector<16x128xbf16>, vector<128x128xbf16>, vector<16x128xf32> -> vector<16x128xf32>
    %c5 = arith.constant 5 : index
    %c0_25 = arith.constant 0 : index
    %43 = vector.load %arg3[%c5, %c0_25] : memref<16x384xf32, #tpu.memory_space<vmem>>, vector<1x128xf32>
    %44 = vector.broadcast %43 : vector<1x128xf32> to vector<16x128xf32>
    %45 = arith.addf %42, %44 : vector<16x128xf32>
    %cst_26 = arith.constant 0.000000e+00 : f32
    %46 = vector.broadcast %cst_26 : f32 to vector<16x128xf32>
    %47 = arith.maximumf %45, %46 : vector<16x128xf32>
    %48 = arith.truncf %47 : vector<16x128xf32> to vector<16x128xbf16>
    %c640 = arith.constant 640 : index
    %c0_27 = arith.constant 0 : index
    %49 = vector.load %arg2[%c640, %c0_27] : memref<1024x384xbf16, #tpu.memory_space<vmem>>, vector<128x256xbf16>
    %cst_28 = arith.constant dense<0.000000e+00> : vector<16x256xf32>
    %50 = tpu.matmul %48, %49, %cst_28 {dimension_numbers = #tpu.dot_dimension_numbers<[1], [0], [0], [1], [0, 0, 1, 1], [], []>} : vector<16x128xbf16>, vector<128x256xbf16>, vector<16x256xf32> -> vector<16x256xf32>
    %c6 = arith.constant 6 : index
    %c0_29 = arith.constant 0 : index
    %51 = vector.load %arg3[%c6, %c0_29] : memref<16x384xf32, #tpu.memory_space<vmem>>, vector<1x256xf32>
    %52 = vector.broadcast %51 : vector<1x256xf32> to vector<16x256xf32>
    %53 = arith.addf %50, %52 : vector<16x256xf32>
    %cst_30 = arith.constant 0.000000e+00 : f32
    %54 = vector.broadcast %cst_30 : f32 to vector<16x256xf32>
    %55 = arith.maximumf %53, %54 : vector<16x256xf32>
    %56 = arith.truncf %55 : vector<16x256xf32> to vector<16x256xbf16>
    %c768 = arith.constant 768 : index
    %c0_31 = arith.constant 0 : index
    %57 = vector.load %arg2[%c768, %c0_31] : memref<1024x384xbf16, #tpu.memory_space<vmem>>, vector<256x256xbf16>
    %cst_32 = arith.constant dense<0.000000e+00> : vector<16x256xf32>
    %58 = tpu.matmul %56, %57, %cst_32 {dimension_numbers = #tpu.dot_dimension_numbers<[1], [0], [0], [1], [0, 0, 1, 1], [], []>} : vector<16x256xbf16>, vector<256x256xbf16>, vector<16x256xf32> -> vector<16x256xf32>
    %c7 = arith.constant 7 : index
    %c0_33 = arith.constant 0 : index
    %59 = vector.load %arg3[%c7, %c0_33] : memref<16x384xf32, #tpu.memory_space<vmem>>, vector<1x256xf32>
    %60 = vector.broadcast %59 : vector<1x256xf32> to vector<16x256xf32>
    %61 = arith.addf %58, %60 : vector<16x256xf32>
    %cst_34 = arith.constant 0.000000e+00 : f32
    %62 = vector.broadcast %cst_34 : f32 to vector<16x256xf32>
    %63 = arith.maximumf %61, %62 : vector<16x256xf32>
    %64 = arith.truncf %63 : vector<16x256xf32> to vector<16x256xbf16>
    %c512_35 = arith.constant 512 : index
    %c256_36 = arith.constant 256 : index
    %65 = vector.load %arg2[%c512_35, %c256_36] : memref<1024x384xbf16, #tpu.memory_space<vmem>>, vector<256x128xbf16>
    %cst_37 = arith.constant dense<0.000000e+00> : vector<16x128xf32>
    %66 = tpu.matmul %64, %65, %cst_37 {dimension_numbers = #tpu.dot_dimension_numbers<[1], [0], [0], [1], [0, 0, 1, 1], [], []>} : vector<16x256xbf16>, vector<256x128xbf16>, vector<16x128xf32> -> vector<16x128xf32>
    %c8 = arith.constant 8 : index
    %c0_38 = arith.constant 0 : index
    %67 = vector.load %arg3[%c8, %c0_38] : memref<16x384xf32, #tpu.memory_space<vmem>>, vector<1x128xf32>
    %68 = vector.broadcast %67 : vector<1x128xf32> to vector<16x128xf32>
    %69 = arith.addf %66, %68 : vector<16x128xf32>
    %c0_39 = arith.constant 0 : index
    %c0_40 = arith.constant 0 : index
    %70 = vector.load %arg4[%c0_39, %c0_40] : memref<16x128xf32, #tpu.memory_space<vmem>>, vector<16x128xf32>
    tpu.vector_store %arg4[%c0_39, %c0_40], %69 {strides = array<i32>} : memref<16x128xf32, #tpu.memory_space<vmem>>, vector<16x128xf32>,
    return
  }
  func.func @transform_0(%arg0: i32) -> (i32, i32) {
    %c0_i32 = arith.constant 0 : i32
    %c0_i32_0 = arith.constant 0 : i32
    return %arg0, %c0_i32 : i32, i32
  }
  func.func @transform_1(%arg0: i32) -> (i32, i32) {
    %c0_i32 = arith.constant 0 : i32
    %c0_i32_0 = arith.constant 0 : i32
    %c0_i32_1 = arith.constant 0 : i32
    return %c0_i32, %c0_i32_0 : i32, i32
  }
  func.func @transform_2(%arg0: i32) -> (i32, i32) {
    %c0_i32 = arith.constant 0 : i32
    %c0_i32_0 = arith.constant 0 : i32
    %c0_i32_1 = arith.constant 0 : i32
    return %c0_i32, %c0_i32_0 : i32, i32
  }
  func.func @transform_3(%arg0: i32) -> (i32, i32) {
    %c0_i32 = arith.constant 0 : i32
    %c0_i32_0 = arith.constant 0 : i32
    return %arg0, %c0_i32 : i32, i32
  }
}

</mosaic_0001>

<llo_original>
// kernel: forward.1
$region0: #{forward.1}
  #allocation0 [shape = 'u32[]', space=smem, size = 0x4, offset = 0x4, fixed_abs, tag = 'smem constant byte address 0x4 - core index']
  #allocation1 [shape = 'u32[144,128]{1,0:T(1,128)}', space=vmem, size = 0x12000, scoped, tag = 'internal scratch']
  %s0 = inlined_call_operand.vmem [shape: bf16[16,128], index: 0, kind: input, shape index: {}]
  %s1 = inlined_call_operand.hbm [shape: bf16[1024,384], index: 1, kind: input, shape index: {}]
  %s2 = inlined_call_operand.vmem [shape: f32[16,384], index: 2, kind: input, shape index: {}]
  %s3 = inlined_call_operand.vmem [shape: f32[16,128], index: 3, kind: output, shape index: {}]
  %s4 = sld [smem:[#allocation0]]
  $region26: #{forward.1} parent=0
    _
  %s6 = ssub.s32 1, %s4
  %s7 = scalar_select 0, %s6, %s4
  $region1: #{forward.1} parent=0
    #allocation2 [shape = 'u8[786432]{0}', space=vmem, size = 0xc0000, scoped, tag = 'input window, operand 1, single buffered']
    #allocation3 [shape = 's32[1]{0}', space=sflag, size = 0x4, scoped, tag = 'scoped memory for forward.1']
    %8 = vsyncpa [#allocation3], 0
    // Predicated region
    $region2: #{forward.1} parent=1 // pred_check
      _
    $region3: #{forward.1} parent=1 // pred_check_branch
      %10 = sbr.rel (0) target = $region5
    $region4: #{forward.1} parent=1 // pred_region
      _
    $region5: #{forward.1} parent=1 // pred_fallthru
      _
    // Predicated region
    $region6: #{forward.1} parent=1 // pred_check
      _
    $region7: #{forward.1} parent=1 // pred_check_branch
      %12 = sbr.rel (0) target = $region9
    $region8: #{forward.1} parent=1 // pred_region
      %s14 = ssub.s32 24576, 24576
      %15 = vsyncadd [#allocation3], %s14
      %s16 = sshll.u32 [#allocation2], 4
      %s17 = int_to_ptr.vmem [resolvable:$true] %s16
      %22 = dma.hbm_to_vmem [thread:$0]  %s1, 24576, %s17, [#allocation3], 192, 192, 12
    $region9: #{forward.1} parent=1 // pred_fallthru
      _
    // Predicated region
    $region10: #{forward.1} parent=1 // pred_check
      _
    $region11: #{forward.1} parent=1 // pred_check_branch
      %24 = sbr.rel (0) target = $region13
    $region12: #{forward.1} parent=1 // pred_region
      _
    $region13: #{forward.1} parent=1 // pred_fallthru
      _
    // Predicated region
    $region14: #{forward.1} parent=1 // pred_check
      _
    $region15: #{forward.1} parent=1 // pred_check_branch
      %26 = sbr.rel (0) target = $region17
    $region16: #{forward.1} parent=1 // pred_region
      %27 = dma.done [#allocation3], 24576
    $region17: #{forward.1} parent=1 // pred_fallthru
      _
    %v29 = vld [vmem:[%s0] sm:$0xf]
    %v30 = vld [vmem:[%s0 + $0x4] sm:$0xf]
    %v31 = vld [vmem:[#allocation2] sm:$0xff]
    %v32 = vld [vmem:[#allocation2 + $0x8] sm:$0xf]
    %v33 = vld [vmem:[#allocation2 + $0xc] sm:$0xff]
    %v34 = vld [vmem:[#allocation2 + $0x14] sm:$0xf]
    %v35 = vld [vmem:[#allocation2 + $0x18] sm:$0xff]
    %v36 = vld [vmem:[#allocation2 + $0x20] sm:$0xf]
    %v37 = vld [vmem:[#allocation2 + $0x24] sm:$0xff]
    %v38 = vld [vmem:[#allocation2 + $0x2c] sm:$0xf]
    %v39 = vld [vmem:[#allocation2 + $0x30] sm:$0xff]
    %v40 = vld [vmem:[#allocation2 + $0x38] sm:$0xf]
    %v41 = vld [vmem:[#allocation2 + $0x3c] sm:$0xff]
    %v42 = vld [vmem:[#allocation2 + $0x44] sm:$0xf]
    %v43 = vld [vmem:[#allocation2 + $0x48] sm:$0xff]
    %v44 = vld [vmem:[#allocation2 + $0x50] sm:$0xf]
    %v45 = vld [vmem:[#allocation2 + $0x54] sm:$0xff]
    %v46 = vld [vmem:[#allocation2 + $0x5c] sm:$0xf]
    %v47 = vld [vmem:[#allocation2 + $0x60] sm:$0xff]
    %v48 = vld [vmem:[#allocation2 + $0x68] sm:$0xf]
    %v49 = vld [vmem:[#allocation2 + $0x6c] sm:$0xff]
    %v50 = vld [vmem:[#allocation2 + $0x74] sm:$0xf]
    %v51 = vld [vmem:[#allocation2 + $0x78] sm:$0xff]
    %v52 = vld [vmem:[#allocation2 + $0x80] sm:$0xf]
    %v53 = vld [vmem:[#allocation2 + $0x84] sm:$0xff]
    %v54 = vld [vmem:[#allocation2 + $0x8c] sm:$0xf]
    %v55 = vld [vmem:[#allocation2 + $0x90] sm:$0xff]
    %v56 = vld [vmem:[#allocation2 + $0x98] sm:$0xf]
    %v57 = vld [vmem:[#allocation2 + $0x9c] sm:$0xff]
    %v58 = vld [vmem:[#allocation2 + $0xa4] sm:$0xf]
    %v59 = vld [vmem:[#allocation2 + $0xa8] sm:$0xff]
    %v60 = vld [vmem:[#allocation2 + $0xb0] sm:$0xf]
    %v61 = vld [vmem:[#allocation2 + $0xb4] sm:$0xff]
    %v62 = vld [vmem:[#allocation2 + $0xbc] sm:$0xf]
    %v63 = vld [vmem:[%s2] ss:$8 sm:$0x7]
    %v65 = vlaneseq
    %v66 = vshrl.u32 %v65, 7
    %v67 = vsub.s32 0, %v66
    %v68 = vrot.slane %v63, %v67
    %v69 = vlaneseq
    %v70 = vshrl.u32 %v69, 7
    %v71 = vsub.s32 1, %v70
    %v72 = vrot.slane %v63, %v71
    %v73 = vlaneseq
    %v74 = vshrl.u32 %v73, 7
    %v75 = vsub.s32 2, %v74
    %v76 = vrot.slane %v63, %v75
    %v82 = vunpack.c.l.b16 %v29
    %v83 = vunpack.c.l.b16 %v30
    %v84 = vpack.c.b16 %v83, %v82
    %v118 = vunpack.c.l.b16 %v31
    %v119 = vunpack.c.h.b16 %v31
    %v120 = vunpack.c.l.b16 %v32
    %v121 = vunpack.c.l.b16 %v33
    %v122 = vunpack.c.h.b16 %v33
    %v123 = vunpack.c.l.b16 %v34
    %v124 = vunpack.c.l.b16 %v35
    %v125 = vunpack.c.h.b16 %v35
    %v126 = vunpack.c.l.b16 %v36
    %v127 = vunpack.c.l.b16 %v37
    %v128 = vunpack.c.h.b16 %v37
    %v129 = vunpack.c.l.b16 %v38
    %v130 = vunpack.c.l.b16 %v39
    %v131 = vunpack.c.h.b16 %v39
    %v132 = vunpack.c.l.b16 %v40
    %v133 = vunpack.c.l.b16 %v41
    %v134 = vunpack.c.h.b16 %v41
    %v135 = vunpack.c.l.b16 %v42
    %v136 = vunpack.c.l.b16 %v43
    %v137 = vunpack.c.h.b16 %v43
    %v138 = vunpack.c.l.b16 %v44
    %v139 = vunpack.c.l.b16 %v45
    %v140 = vunpack.c.h.b16 %v45
    %v141 = vunpack.c.l.b16 %v46
    %v142 = vunpack.c.l.b16 %v47
    %v143 = vunpack.c.h.b16 %v47
    %v144 = vunpack.c.l.b16 %v48
    %v145 = vunpack.c.l.b16 %v49
    %v146 = vunpack.c.h.b16 %v49
    %v147 = vunpack.c.l.b16 %v50
    %v148 = vunpack.c.l.b16 %v51
    %v149 = vunpack.c.h.b16 %v51
    %v150 = vunpack.c.l.b16 %v52
    %v151 = vunpack.c.l.b16 %v53
    %v152 = vunpack.c.h.b16 %v53
    %v153 = vunpack.c.l.b16 %v54
    %v154 = vunpack.c.l.b16 %v55
    %v155 = vunpack.c.h.b16 %v55
    %v156 = vunpack.c.l.b16 %v56
    %v157 = vunpack.c.l.b16 %v57
    %v158 = vunpack.c.h.b16 %v57
    %v159 = vunpack.c.l.b16 %v58
    %v160 = vunpack.c.l.b16 %v59
    %v161 = vunpack.c.h.b16 %v59
    %v162 = vunpack.c.l.b16 %v60
    %v163 = vunpack.c.l.b16 %v61
    %v164 = vunpack.c.h.b16 %v61
    %v165 = vunpack.c.l.b16 %v62
    %v166 = vpack.c.b16 %v121, %v118
    %v167 = vpack.c.b16 %v122, %v119
    %v168 = vpack.c.b16 %v123, %v120
    %v169 = vpack.c.b16 %v127, %v124
    %v170 = vpack.c.b16 %v128, %v125
    %v171 = vpack.c.b16 %v129, %v126
    %v172 = vpack.c.b16 %v133, %v130
    %v173 = vpack.c.b16 %v134, %v131
    %v174 = vpack.c.b16 %v135, %v132
    %v175 = vpack.c.b16 %v139, %v136
    %v176 = vpack.c.b16 %v140, %v137
    %v177 = vpack.c.b16 %v141, %v138
    %v178 = vpack.c.b16 %v145, %v142
    %v179 = vpack.c.b16 %v146, %v143
    %v180 = vpack.c.b16 %v147, %v144
    %v181 = vpack.c.b16 %v151, %v148
    %v182 = vpack.c.b16 %v152, %v149
    %v183 = vpack.c.b16 %v153, %v150
    %v184 = vpack.c.b16 %v157, %v154
    %v185 = vpack.c.b16 %v158, %v155
    %v186 = vpack.c.b16 %v159, %v156
    %v187 = vpack.c.b16 %v163, %v160
    %v188 = vpack.c.b16 %v164, %v161
    %v189 = vpack.c.b16 %v165, %v162
    %214 = vmatprep.subr.bf16.mxu0 %v188
    %215 = vmatpush1.bf16.msra.mxu0 %v187
    %216 = vmatprep.subr.bf16.mxu0 %v185
    %217 = vmatpush1.bf16.msra.mxu0 %v184
    %218 = vmatprep.subr.bf16.mxu0 %v182
    %219 = vmatpush1.bf16.msra.mxu0 %v181
    %220 = vmatprep.subr.bf16.mxu0 %v179
    %221 = vmatpush1.bf16.msra.mxu0 %v178
    %222 = vmatprep.subr.bf16.mxu0 %v176
    %223 = vmatpush1.bf16.msra.mxu0 %v175
    %224 = vmatprep.subr.bf16.mxu0 %v173
    %225 = vmatpush1.bf16.msra.mxu0 %v172
    %226 = vmatprep.subr.bf16.mxu0 %v170
    %227 = vmatpush1.bf16.msra.mxu0 %v169
    %228 = vmatprep.subr.bf16.mxu0 %v167
    %229 = vmatpush1.bf16.msra.mxu0 %v166
    %230 = vmatprep.subr.bf16.mxu0 0
    %231 = vmatpush2.bf16.msra.mxu0 0
    %232 = vmatprep.subr.bf16.mxu0 0
    %233 = vmatpush2.bf16.msra.mxu0 0
    %234 = vmatprep.subr.bf16.mxu0 0
    %235 = vmatpush2.bf16.msra.mxu0 0
    %236 = vmatprep.subr.bf16.mxu0 0
    %237 = vmatpush2.bf16.msra.mxu0 0
    %238 = vmatprep.subr.bf16.mxu0 0
    %239 = vmatpush2.bf16.msra.mxu0 0
    %240 = vmatprep.subr.bf16.mxu0 0
    %241 = vmatpush2.bf16.msra.mxu0 0
    %242 = vmatprep.subr.bf16.mxu0 0
    %243 = vmatpush2.bf16.msra.mxu0 0
    %244 = vmatprep.subr.bf16.mxu0 0
    %245 = vmatpush2.bf16.msra.mxu0 0
    %246 = vmatprep.mubr.bf16.mxu0 0
    %247 = vmatmul.mubr.bf16.gmra.mxu0 %v84
    %v248 = vpop.f32.mrf.mxu0
    %v249 = vadd.f32 %v68, %v248
    %v250 = vpop.f32.mrf.mxu0
    %v251 = vadd.f32 %v72, %v250
    %v252 = vpop.f32.mrf.mxu0
    %v253 = vadd.f32 %v68, %v252
    %v254 = vpop.f32.mrf.mxu0
    %v255 = vadd.f32 %v72, %v254
    %256 = vdwg.mxu0
    %257 = vmatprep.subr.bf16.mxu0 0
    %258 = vmatpush1.bf16.msra.mxu0 %v189
    %259 = vmatprep.subr.bf16.mxu0 0
    %260 = vmatpush1.bf16.msra.mxu0 %v186
    %261 = vmatprep.subr.bf16.mxu0 0
    %262 = vmatpush1.bf16.msra.mxu0 %v183
    %263 = vmatprep.subr.bf16.mxu0 0
    %264 = vmatpush1.bf16.msra.mxu0 %v180
    %265 = vmatprep.subr.bf16.mxu0 0
    %266 = vmatpush1.bf16.msra.mxu0 %v177
    %267 = vmatprep.subr.bf16.mxu0 0
    %268 = vmatpush1.bf16.msra.mxu0 %v174
    %269 = vmatprep.subr.bf16.mxu0 0
    %270 = vmatpush1.bf16.msra.mxu0 %v171
    %271 = vmatprep.subr.bf16.mxu0 0
    %272 = vmatpush1.bf16.msra.mxu0 %v168
    %273 = vmatprep.subr.bf16.mxu0 0
    %274 = vmatpush2.bf16.msra.mxu0 0
    %275 = vmatprep.subr.bf16.mxu0 0
    %276 = vmatpush2.bf16.msra.mxu0 0
    %277 = vmatprep.subr.bf16.mxu0 0
    %278 = vmatpush2.bf16.msra.mxu0 0
    %279 = vmatprep.subr.bf16.mxu0 0
    %280 = vmatpush2.bf16.msra.mxu0 0
    %281 = vmatprep.subr.bf16.mxu0 0
    %282 = vmatpush2.bf16.msra.mxu0 0
    %283 = vmatprep.subr.bf16.mxu0 0
    %284 = vmatpush2.bf16.msra.mxu0 0
    %285 = vmatprep.subr.bf16.mxu0 0
    %286 = vmatpush2.bf16.msra.mxu0 0
    %287 = vmatprep.subr.bf16.mxu0 0
    %288 = vmatpush2.bf16.msra.mxu0 0
    %289 = vmatprep.mubr.bf16.mxu0 0
    %290 = vmatmul.mubr.bf16.gmra.mxu0 %v84
    %v291 = vpop.f32.mrf.mxu0
    %v292 = vadd.f32 %v76, %v291
    %v293 = vpop.f32.mrf.mxu0
    %v294 = vpop.f32.mrf.mxu0
    %v295 = vadd.f32 %v76, %v294
    %v296 = vpop.f32.mrf.mxu0
    %297 = vdwg.mxu0
    %v298 = vmax.f32 %v249, 0.0
    %v299 = vmax.f32 %v251, 0.0
    %v300 = vmax.f32 %v292, 0.0
    %v301 = vmax.f32 %v253, 0.0
    %v302 = vmax.f32 %v255, 0.0
    %v303 = vmax.f32 %v295, 0.0
    %v304 = vpack.c.bf16 %v301, %v298
    %v305 = vpack.c.bf16 %v302, %v299
    %v306 = vpack.c.bf16 %v303, %v300
    %v307 = vld [vmem:[#allocation2 + $0xc0] sm:$0xff]
    %v308 = vld [vmem:[#allocation2 + $0xcc] sm:$0xff]
    %v309 = vld [vmem:[#allocation2 + $0xd8] sm:$0xff]
    %v310 = vld [vmem:[#allocation2 + $0xe4] sm:$0xff]
    %v311 = vld [vmem:[#allocation2 + $0xf0] sm:$0xff]
    %v312 = vld [vmem:[#allocation2 + $0xfc] sm:$0xff]
    %v313 = vld [vmem:[#allocation2 + $0x108] sm:$0xff]
    %v314 = vld [vmem:[#allocation2 + $0x114] sm:$0xff]
    %v315 = vld [vmem:[#allocation2 + $0x120] sm:$0xff]
    %v316 = vld [vmem:[#allocation2 + $0x12c] sm:$0xff]
    %v317 = vld [vmem:[#allocation2 + $0x138] sm:$0xff]
    %v318 = vld [vmem:[#allocation2 + $0x144] sm:$0xff]
    %v319 = vld [vmem:[#allocation2 + $0x150] sm:$0xff]
    %v320 = vld [vmem:[#allocation2 + $0x15c] sm:$0xff]
    %v321 = vld [vmem:[#allocation2 + $0x168] sm:$0xff]
    %v322 = vld [vmem:[#allocation2 + $0x174] sm:$0xff]
    %v323 = vld [vmem:[#allocation2 + $0x180] sm:$0xff]
    %v324 = vld [vmem:[#allocation2 + $0x18c] sm:$0xff]
    %v325 = vld [vmem:[#allocation2 + $0x198] sm:$0xff]
    %v326 = vld [vmem:[#allocation2 + $0x1a4] sm:$0xff]
    %v327 = vld [vmem:[#allocation2 + $0x1b0] sm:$0xff]
    %v328 = vld [vmem:[#allocation2 + $0x1bc] sm:$0xff]
    %v329 = vld [vmem:[#allocation2 + $0x1c8] sm:$0xff]
    %v330 = vld [vmem:[#allocation2 + $0x1d4] sm:$0xff]
    %v331 = vld [vmem:[#allocation2 + $0x1e0] sm:$0xff]
    %v332 = vld [vmem:[#allocation2 + $0x1ec] sm:$0xff]
    %v333 = vld [vmem:[#allocation2 + $0x1f8] sm:$0xff]
    %v334 = vld [vmem:[#allocation2 + $0x204] sm:$0xff]
    %v335 = vld [vmem:[#allocation2 + $0x210] sm:$0xff]
    %v336 = vld [vmem:[#allocation2 + $0x21c] sm:$0xff]
    %v337 = vld [vmem:[#allocation2 + $0x228] sm:$0xff]
    %v338 = vld [vmem:[#allocation2 + $0x234] sm:$0xff]
    %v339 = vld [vmem:[#allocation2 + $0x240] sm:$0xff]
    %v340 = vld [vmem:[#allocation2 + $0x24c] sm:$0xff]
    %v341 = vld [vmem:[#allocation2 + $0x258] sm:$0xff]
    %v342 = vld [vmem:[#allocation2 + $0x264] sm:$0xff]
    %v343 = vld [vmem:[#allocation2 + $0x270] sm:$0xff]
    %v344 = vld [vmem:[#allocation2 + $0x27c] sm:$0xff]
    %v345 = vld [vmem:[#allocation2 + $0x288] sm:$0xff]
    %v346 = vld [vmem:[#allocation2 + $0x294] sm:$0xff]
    %v347 = vld [vmem:[#allocation2 + $0x2a0] sm:$0xff]
    %v348 = vld [vmem:[#allocation2 + $0x2ac] sm:$0xff]
    %v349 = vld [vmem:[#allocation2 + $0x2b8] sm:$0xff]
    %v350 = vld [vmem:[#allocation2 + $0x2c4] sm:$0xff]
    %v351 = vld [vmem:[#allocation2 + $0x2d0] sm:$0xff]
    %v352 = vld [vmem:[#allocation2 + $0x2dc] sm:$0xff]
    %v353 = vld [vmem:[#allocation2 + $0x2e8] sm:$0xff]
    %v354 = vld [vmem:[#allocation2 + $0x2f4] sm:$0xff]
    %s355 = scalar_lea.vmem %s2, 1
    %v356 = vld [vmem:[%s355] ss:$8 sm:$0x3]
    %v358 = vlaneseq
    %v359 = vshrl.u32 %v358, 7
    %v360 = vsub.s32 0, %v359
    %v361 = vrot.slane %v356, %v360
    %v362 = vlaneseq
    %v363 = vshrl.u32 %v362, 7
    %v364 = vsub.s32 1, %v363
    %v365 = vrot.slane %v356, %v364
    %v416 = vunpack.c.l.b16 %v307
    %v417 = vunpack.c.h.b16 %v307
    %v418 = vunpack.c.l.b16 %v308
    %v419 = vunpack.c.h.b16 %v308
    %v420 = vunpack.c.l.b16 %v309
    %v421 = vunpack.c.h.b16 %v309
    %v422 = vunpack.c.l.b16 %v310
    %v423 = vunpack.c.h.b16 %v310
    %v424 = vunpack.c.l.b16 %v311
    %v425 = vunpack.c.h.b16 %v311
    %v426 = vunpack.c.l.b16 %v312
    %v427 = vunpack.c.h.b16 %v312
    %v428 = vunpack.c.l.b16 %v313
    %v429 = vunpack.c.h.b16 %v313
    %v430 = vunpack.c.l.b16 %v314
    %v431 = vunpack.c.h.b16 %v314
    %v432 = vunpack.c.l.b16 %v315
    %v433 = vunpack.c.h.b16 %v315
    %v434 = vunpack.c.l.b16 %v316
    %v435 = vunpack.c.h.b16 %v316
    %v436 = vunpack.c.l.b16 %v317
    %v437 = vunpack.c.h.b16 %v317
    %v438 = vunpack.c.l.b16 %v318
    %v439 = vunpack.c.h.b16 %v318
    %v440 = vunpack.c.l.b16 %v319
    %v441 = vunpack.c.h.b16 %v319
    %v442 = vunpack.c.l.b16 %v320
    %v443 = vunpack.c.h.b16 %v320
    %v444 = vunpack.c.l.b16 %v321
    %v445 = vunpack.c.h.b16 %v321
    %v446 = vunpack.c.l.b16 %v322
    %v447 = vunpack.c.h.b16 %v322
    %v448 = vunpack.c.l.b16 %v323
    %v449 = vunpack.c.h.b16 %v323
    %v450 = vunpack.c.l.b16 %v324
    %v451 = vunpack.c.h.b16 %v324
    %v452 = vunpack.c.l.b16 %v325
    %v453 = vunpack.c.h.b16 %v325
    %v454 = vunpack.c.l.b16 %v326
    %v455 = vunpack.c.h.b16 %v326
    %v456 = vunpack.c.l.b16 %v327
    %v457 = vunpack.c.h.b16 %v327
    %v458 = vunpack.c.l.b16 %v328
    %v459 = vunpack.c.h.b16 %v328
    %v460 = vunpack.c.l.b16 %v329
    %v461 = vunpack.c.h.b16 %v329
    %v462 = vunpack.c.l.b16 %v330
    %v463 = vunpack.c.h.b16 %v330
    %v464 = vunpack.c.l.b16 %v331
    %v465 = vunpack.c.h.b16 %v331
    %v466 = vunpack.c.l.b16 %v332
    %v467 = vunpack.c.h.b16 %v332
    %v468 = vunpack.c.l.b16 %v333
    %v469 = vunpack.c.h.b16 %v333
    %v470 = vunpack.c.l.b16 %v334
    %v471 = vunpack.c.h.b16 %v334
    %v472 = vunpack.c.l.b16 %v335
    %v473 = vunpack.c.h.b16 %v335
    %v474 = vunpack.c.l.b16 %v336
    %v475 = vunpack.c.h.b16 %v336
    %v476 = vunpack.c.l.b16 %v337
    %v477 = vunpack.c.h.b16 %v337
    %v478 = vunpack.c.l.b16 %v338
    %v479 = vunpack.c.h.b16 %v338
    %v480 = vunpack.c.l.b16 %v339
    %v481 = vunpack.c.h.b16 %v339
    %v482 = vunpack.c.l.b16 %v340
    %v483 = vunpack.c.h.b16 %v340
    %v484 = vunpack.c.l.b16 %v341
    %v485 = vunpack.c.h.b16 %v341
    %v486 = vunpack.c.l.b16 %v342
    %v487 = vunpack.c.h.b16 %v342
    %v488 = vunpack.c.l.b16 %v343
    %v489 = vunpack.c.h.b16 %v343
    %v490 = vunpack.c.l.b16 %v344
    %v491 = vunpack.c.h.b16 %v344
    %v492 = vunpack.c.l.b16 %v345
    %v493 = vunpack.c.h.b16 %v345
    %v494 = vunpack.c.l.b16 %v346
    %v495 = vunpack.c.h.b16 %v346
    %v496 = vunpack.c.l.b16 %v347
    %v497 = vunpack.c.h.b16 %v347
    %v498 = vunpack.c.l.b16 %v348
    %v499 = vunpack.c.h.b16 %v348
    %v500 = vunpack.c.l.b16 %v349
    %v501 = vunpack.c.h.b16 %v349
    %v502 = vunpack.c.l.b16 %v350
    %v503 = vunpack.c.h.b16 %v350
    %v504 = vunpack.c.l.b16 %v351
    %v505 = vunpack.c.h.b16 %v351
    %v506 = vunpack.c.l.b16 %v352
    %v507 = vunpack.c.h.b16 %v352
    %v508 = vunpack.c.l.b16 %v353
    %v509 = vunpack.c.h.b16 %v353
    %v510 = vunpack.c.l.b16 %v354
    %v511 = vunpack.c.h.b16 %v354
    %v512 = vpack.c.b16 %v418, %v416
    %v513 = vpack.c.b16 %v419, %v417
    %v514 = vpack.c.b16 %v422, %v420
    %v515 = vpack.c.b16 %v423, %v421
    %v516 = vpack.c.b16 %v426, %v424
    %v517 = vpack.c.b16 %v427, %v425
    %v518 = vpack.c.b16 %v430, %v428
    %v519 = vpack.c.b16 %v431, %v429
    %v520 = vpack.c.b16 %v434, %v432
    %v521 = vpack.c.b16 %v435, %v433
    %v522 = vpack.c.b16 %v438, %v436
    %v523 = vpack.c.b16 %v439, %v437
    %v524 = vpack.c.b16 %v442, %v440
    %v525 = vpack.c.b16 %v443, %v441
    %v526 = vpack.c.b16 %v446, %v444
    %v527 = vpack.c.b16 %v447, %v445
    %v528 = vpack.c.b16 %v450, %v448
    %v529 = vpack.c.b16 %v451, %v449
    %v530 = vpack.c.b16 %v454, %v452
    %v531 = vpack.c.b16 %v455, %v453
    %v532 = vpack.c.b16 %v458, %v456
    %v533 = vpack.c.b16 %v459, %v457
    %v534 = vpack.c.b16 %v462, %v460
    %v535 = vpack.c.b16 %v463, %v461
    %v536 = vpack.c.b16 %v466, %v464
    %v537 = vpack.c.b16 %v467, %v465
    %v538 = vpack.c.b16 %v470, %v468
    %v539 = vpack.c.b16 %v471, %v469
    %v540 = vpack.c.b16 %v474, %v472
    %v541 = vpack.c.b16 %v475, %v473
    %v542 = vpack.c.b16 %v478, %v476
    %v543 = vpack.c.b16 %v479, %v477
    %v544 = vpack.c.b16 %v482, %v480
    %v545 = vpack.c.b16 %v483, %v481
    %v546 = vpack.c.b16 %v486, %v484
    %v547 = vpack.c.b16 %v487, %v485
    %v548 = vpack.c.b16 %v490, %v488
    %v549 = vpack.c.b16 %v491, %v489
    %v550 = vpack.c.b16 %v494, %v492
    %v551 = vpack.c.b16 %v495, %v493
    %v552 = vpack.c.b16 %v498, %v496
    %v553 = vpack.c.b16 %v499, %v497
    %v554 = vpack.c.b16 %v502, %v500
    %v555 = vpack.c.b16 %v503, %v501
    %v556 = vpack.c.b16 %v506, %v504
    %v557 = vpack.c.b16 %v507, %v505
    %v558 = vpack.c.b16 %v510, %v508
    %v559 = vpack.c.b16 %v511, %v509
    %608 = vmatprep.subr.bf16.mxu0 %v527
    %609 = vmatpush1.bf16.msra.mxu0 %v526
    %610 = vmatprep.subr.bf16.mxu0 %v525
    %611 = vmatpush1.bf16.msra.mxu0 %v524
    %612 = vmatprep.subr.bf16.mxu0 %v523
    %613 = vmatpush1.bf16.msra.mxu0 %v522
    %614 = vmatprep.subr.bf16.mxu0 %v521
    %615 = vmatpush1.bf16.msra.mxu0 %v520
    %616 = vmatprep.subr.bf16.mxu0 %v519
    %617 = vmatpush1.bf16.msra.mxu0 %v518
    %618 = vmatprep.subr.bf16.mxu0 %v517
    %619 = vmatpush1.bf16.msra.mxu0 %v516
    %620 = vmatprep.subr.bf16.mxu0 %v515
    %621 = vmatpush1.bf16.msra.mxu0 %v514
    %622 = vmatprep.subr.bf16.mxu0 %v513
    %623 = vmatpush1.bf16.msra.mxu0 %v512
    %624 = vmatprep.subr.bf16.mxu0 %v543
    %625 = vmatpush2.bf16.msra.mxu0 %v542
    %626 = vmatprep.subr.bf16.mxu0 %v541
    %627 = vmatpush2.bf16.msra.mxu0 %v540
    %628 = vmatprep.subr.bf16.mxu0 %v539
    %629 = vmatpush2.bf16.msra.mxu0 %v538
    %630 = vmatprep.subr.bf16.mxu0 %v537
    %631 = vmatpush2.bf16.msra.mxu0 %v536
    %632 = vmatprep.subr.bf16.mxu0 %v535
    %633 = vmatpush2.bf16.msra.mxu0 %v534
    %634 = vmatprep.subr.bf16.mxu0 %v533
    %635 = vmatpush2.bf16.msra.mxu0 %v532
    %636 = vmatprep.subr.bf16.mxu0 %v531
    %637 = vmatpush2.bf16.msra.mxu0 %v530
    %638 = vmatprep.subr.bf16.mxu0 %v529
    %639 = vmatpush2.bf16.msra.mxu0 %v528
    %640 = vmatprep.mubr.bf16.mxu0 %v305
    %641 = vmatmul.mubr.bf16.gmra.mxu0 %v304
    %v642 = vpop.f32.mrf.mxu0
    %v643 = vadd.f32 %v361, %v642
    %v644 = vpop.f32.mrf.mxu0
    %v645 = vadd.f32 %v365, %v644
    %v646 = vpop.f32.mrf.mxu0
    %v647 = vadd.f32 %v361, %v646
    %v648 = vpop.f32.mrf.mxu0
    %v649 = vadd.f32 %v365, %v648
    %650 = vdwg.mxu0
    %651 = vmatprep.subr.bf16.mxu0 %v559
    %652 = vmatpush1.bf16.msra.mxu0 %v558
    %653 = vmatprep.subr.bf16.mxu0 %v557
    %654 = vmatpush1.bf16.msra.mxu0 %v556
    %655 = vmatprep.subr.bf16.mxu0 %v555
    %656 = vmatpush1.bf16.msra.mxu0 %v554
    %657 = vmatprep.subr.bf16.mxu0 %v553
    %658 = vmatpush1.bf16.msra.mxu0 %v552
    %659 = vmatprep.subr.bf16.mxu0 %v551
    %660 = vmatpush1.bf16.msra.mxu0 %v550
    %661 = vmatprep.subr.bf16.mxu0 %v549
    %662 = vmatpush1.bf16.msra.mxu0 %v548
    %663 = vmatprep.subr.bf16.mxu0 %v547
    %664 = vmatpush1.bf16.msra.mxu0 %v546
    %665 = vmatprep.subr.bf16.mxu0 %v545
    %666 = vmatpush1.bf16.msra.mxu0 %v544
    %667 = vmatprep.subr.bf16.mxu0 0
    %668 = vmatpush2.bf16.msra.mxu0 0
    %669 = vmatprep.subr.bf16.mxu0 0
    %670 = vmatpush2.bf16.msra.mxu0 0
    %671 = vmatprep.subr.bf16.mxu0 0
    %672 = vmatpush2.bf16.msra.mxu0 0
    %673 = vmatprep.subr.bf16.mxu0 0
    %674 = vmatpush2.bf16.msra.mxu0 0
    %675 = vmatprep.subr.bf16.mxu0 0
    %676 = vmatpush2.bf16.msra.mxu0 0
    %677 = vmatprep.subr.bf16.mxu0 0
    %678 = vmatpush2.bf16.msra.mxu0 0
    %679 = vmatprep.subr.bf16.mxu0 0
    %680 = vmatpush2.bf16.msra.mxu0 0
    %681 = vmatprep.subr.bf16.mxu0 0
    %682 = vmatpush2.bf16.msra.mxu0 0
    %683 = vmatprep.mubr.bf16.mxu0 0
    %684 = vmatmul.mubr.bf16.gmra.mxu0 %v306
    %v685 = vpop.f32.mrf.mxu0
    %v686 = vadd.f32 %v643, %v685
    %v687 = vpop.f32.mrf.mxu0
    %v688 = vadd.f32 %v645, %v687
    %v689 = vpop.f32.mrf.mxu0
    %v690 = vadd.f32 %v647, %v689
    %v691 = vpop.f32.mrf.mxu0
    %v692 = vadd.f32 %v649, %v691
    %693 = vdwg.mxu0
    %v694 = vmax.f32 %v686, 0.0
    %v695 = vmax.f32 %v688, 0.0
    %v696 = vmax.f32 %v690, 0.0
    %v697 = vmax.f32 %v692, 0.0
    %v698 = vpack.c.bf16 %v696, %v694
    %v699 = vpack.c.bf16 %v697, %v695
    %v700 = vld [vmem:[#allocation2 + $0xc8] sm:$0xf]
    %v701 = vld [vmem:[#allocation2 + $0xd4] sm:$0xf]
    %v702 = vld [vmem:[#allocation2 + $0xe0] sm:$0xf]
    %v703 = vld [vmem:[#allocation2 + $0xec] sm:$0xf]
    %v704 = vld [vmem:[#allocation2 + $0xf8] sm:$0xf]
    %v705 = vld [vmem:[#allocation2 + $0x104] sm:$0xf]
    %v706 = vld [vmem:[#allocation2 + $0x110] sm:$0xf]
    %v707 = vld [vmem:[#allocation2 + $0x11c] sm:$0xf]
    %v708 = vld [vmem:[#allocation2 + $0x128] sm:$0xf]
    %v709 = vld [vmem:[#allocation2 + $0x134] sm:$0xf]
    %v710 = vld [vmem:[#allocation2 + $0x140] sm:$0xf]
    %v711 = vld [vmem:[#allocation2 + $0x14c] sm:$0xf]
    %v712 = vld [vmem:[#allocation2 + $0x158] sm:$0xf]
    %v713 = vld [vmem:[#allocation2 + $0x164] sm:$0xf]
    %v714 = vld [vmem:[#allocation2 + $0x170] sm:$0xf]
    %v715 = vld [vmem:[#allocation2 + $0x17c] sm:$0xf]
    %v716 = vld [vmem:[#allocation2 + $0x188] sm:$0xf]
    %v717 = vld [vmem:[#allocation2 + $0x194] sm:$0xf]
    %v718 = vld [vmem:[#allocation2 + $0x1a0] sm:$0xf]
    %v719 = vld [vmem:[#allocation2 + $0x1ac] sm:$0xf]
    %v720 = vld [vmem:[#allocation2 + $0x1b8] sm:$0xf]
    %v721 = vld [vmem:[#allocation2 + $0x1c4] sm:$0xf]
    %v722 = vld [vmem:[#allocation2 + $0x1d0] sm:$0xf]
    %v723 = vld [vmem:[#allocation2 + $0x1dc] sm:$0xf]
    %v724 = vld [vmem:[#allocation2 + $0x1e8] sm:$0xf]
    %v725 = vld [vmem:[#allocation2 + $0x1f4] sm:$0xf]
    %v726 = vld [vmem:[#allocation2 + $0x200] sm:$0xf]
    %v727 = vld [vmem:[#allocation2 + $0x20c] sm:$0xf]
    %v728 = vld [vmem:[#allocation2 + $0x218] sm:$0xf]
    %v729 = vld [vmem:[#allocation2 + $0x224] sm:$0xf]
    %v730 = vld [vmem:[#allocation2 + $0x230] sm:$0xf]
    %v731 = vld [vmem:[#allocation2 + $0x23c] sm:$0xf]
    %v732 = vld [vmem:[%s2 + $0x2] ss:$0 sm:$0xff]
    %v765 = vunpack.c.l.b16 %v700
    %v766 = vunpack.c.l.b16 %v701
    %v767 = vunpack.c.l.b16 %v702
    %v768 = vunpack.c.l.b16 %v703
    %v769 = vunpack.c.l.b16 %v704
    %v770 = vunpack.c.l.b16 %v705
    %v771 = vunpack.c.l.b16 %v706
    %v772 = vunpack.c.l.b16 %v707
    %v773 = vunpack.c.l.b16 %v708
    %v774 = vunpack.c.l.b16 %v709
    %v775 = vunpack.c.l.b16 %v710
    %v776 = vunpack.c.l.b16 %v711
    %v777 = vunpack.c.l.b16 %v712
    %v778 = vunpack.c.l.b16 %v713
    %v779 = vunpack.c.l.b16 %v714
    %v780 = vunpack.c.l.b16 %v715
    %v781 = vunpack.c.l.b16 %v716
    %v782 = vunpack.c.l.b16 %v717
    %v783 = vunpack.c.l.b16 %v718
    %v784 = vunpack.c.l.b16 %v719
    %v785 = vunpack.c.l.b16 %v720
    %v786 = vunpack.c.l.b16 %v721
    %v787 = vunpack.c.l.b16 %v722
    %v788 = vunpack.c.l.b16 %v723
    %v789 = vunpack.c.l.b16 %v724
    %v790 = vunpack.c.l.b16 %v725
    %v791 = vunpack.c.l.b16 %v726
    %v792 = vunpack.c.l.b16 %v727
    %v793 = vunpack.c.l.b16 %v728
    %v794 = vunpack.c.l.b16 %v729
    %v795 = vunpack.c.l.b16 %v730
    %v796 = vunpack.c.l.b16 %v731
    %v797 = vpack.c.b16 %v766, %v765
    %v798 = vpack.c.b16 %v768, %v767
    %v799 = vpack.c.b16 %v770, %v769
    %v800 = vpack.c.b16 %v772, %v771
    %v801 = vpack.c.b16 %v774, %v773
    %v802 = vpack.c.b16 %v776, %v775
    %v803 = vpack.c.b16 %v778, %v777
    %v804 = vpack.c.b16 %v780, %v779
    %v805 = vpack.c.b16 %v782, %v781
    %v806 = vpack.c.b16 %v784, %v783
    %v807 = vpack.c.b16 %v786, %v785
    %v808 = vpack.c.b16 %v788, %v787
    %v809 = vpack.c.b16 %v790, %v789
    %v810 = vpack.c.b16 %v792, %v791
    %v811 = vpack.c.b16 %v794, %v793
    %v812 = vpack.c.b16 %v796, %v795
    %829 = vmatprep.subr.bf16.mxu0 0
    %830 = vmatpush1.bf16.msra.mxu0 %v804
    %831 = vmatprep.subr.bf16.mxu0 0
    %832 = vmatpush1.bf16.msra.mxu0 %v803
    %833 = vmatprep.subr.bf16.mxu0 0
    %834 = vmatpush1.bf16.msra.mxu0 %v802
    %835 = vmatprep.subr.bf16.mxu0 0
    %836 = vmatpush1.bf16.msra.mxu0 %v801
    %837 = vmatprep.subr.bf16.mxu0 0
    %838 = vmatpush1.bf16.msra.mxu0 %v800
    %839 = vmatprep.subr.bf16.mxu0 0
    %840 = vmatpush1.bf16.msra.mxu0 %v799
    %841 = vmatprep.subr.bf16.mxu0 0
    %842 = vmatpush1.bf16.msra.mxu0 %v798
    %843 = vmatprep.subr.bf16.mxu0 0
    %844 = vmatpush1.bf16.msra.mxu0 %v797
    %845 = vmatprep.subr.bf16.mxu0 0
    %846 = vmatpush2.bf16.msra.mxu0 %v812
    %847 = vmatprep.subr.bf16.mxu0 0
    %848 = vmatpush2.bf16.msra.mxu0 %v811
    %849 = vmatprep.subr.bf16.mxu0 0
    %850 = vmatpush2.bf16.msra.mxu0 %v810
    %851 = vmatprep.subr.bf16.mxu0 0
    %852 = vmatpush2.bf16.msra.mxu0 %v809
    %853 = vmatprep.subr.bf16.mxu0 0
    %854 = vmatpush2.bf16.msra.mxu0 %v808
    %855 = vmatprep.subr.bf16.mxu0 0
    %856 = vmatpush2.bf16.msra.mxu0 %v807
    %857 = vmatprep.subr.bf16.mxu0 0
    %858 = vmatpush2.bf16.msra.mxu0 %v806
    %859 = vmatprep.subr.bf16.mxu0 0
    %860 = vmatpush2.bf16.msra.mxu0 %v805
    %861 = vmatprep.mubr.bf16.mxu0 %v699
    %862 = vmatmul.mubr.bf16.gmra.mxu0 %v698
    %v863 = vpop.f32.mrf.mxu0
    %v864 = vadd.f32 %v732, %v863
    %v865 = vpop.f32.mrf.mxu0
    %v866 = vpop.f32.mrf.mxu0
    %v867 = vadd.f32 %v732, %v866
    %v868 = vpop.f32.mrf.mxu0
    %869 = vdwg.mxu0
    %v870 = vmax.f32 %v864, 0.0
    %v871 = vmax.f32 %v867, 0.0
    %v872 = vpack.c.bf16 %v871, %v870
    %v873 = vld [vmem:[#allocation2 + $0x248] sm:$0xf]
    %v874 = vld [vmem:[#allocation2 + $0x254] sm:$0xf]
    %v875 = vld [vmem:[#allocation2 + $0x260] sm:$0xf]
    %v876 = vld [vmem:[#allocation2 + $0x26c] sm:$0xf]
    %v877 = vld [vmem:[#allocation2 + $0x278] sm:$0xf]
    %v878 = vld [vmem:[#allocation2 + $0x284] sm:$0xf]
    %v879 = vld [vmem:[#allocation2 + $0x290] sm:$0xf]
    %v880 = vld [vmem:[#allocation2 + $0x29c] sm:$0xf]
    %v881 = vld [vmem:[#allocation2 + $0x2a8] sm:$0xf]
    %v882 = vld [vmem:[#allocation2 + $0x2b4] sm:$0xf]
    %v883 = vld [vmem:[#allocation2 + $0x2c0] sm:$0xf]
    %v884 = vld [vmem:[#allocation2 + $0x2cc] sm:$0xf]
    %v885 = vld [vmem:[#allocation2 + $0x2d8] sm:$0xf]
    %v886 = vld [vmem:[#allocation2 + $0x2e4] sm:$0xf]
    %v887 = vld [vmem:[#allocation2 + $0x2f0] sm:$0xf]
    %v888 = vld [vmem:[#allocation2 + $0x2fc] sm:$0xf]
    %v889 = vld [vmem:[%s2 + $0x3] ss:$0 sm:$0xff]
    %v906 = vunpack.c.l.b16 %v873
    %v907 = vunpack.c.l.b16 %v874
    %v908 = vunpack.c.l.b16 %v875
    %v909 = vunpack.c.l.b16 %v876
    %v910 = vunpack.c.l.b16 %v877
    %v911 = vunpack.c.l.b16 %v878
    %v912 = vunpack.c.l.b16 %v879
    %v913 = vunpack.c.l.b16 %v880
    %v914 = vunpack.c.l.b16 %v881
    %v915 = vunpack.c.l.b16 %v882
    %v916 = vunpack.c.l.b16 %v883
    %v917 = vunpack.c.l.b16 %v884
    %v918 = vunpack.c.l.b16 %v885
    %v919 = vunpack.c.l.b16 %v886
    %v920 = vunpack.c.l.b16 %v887
    %v921 = vunpack.c.l.b16 %v888
    %v922 = vpack.c.b16 %v907, %v906
    %v923 = vpack.c.b16 %v909, %v908
    %v924 = vpack.c.b16 %v911, %v910
    %v925 = vpack.c.b16 %v913, %v912
    %v926 = vpack.c.b16 %v915, %v914
    %v927 = vpack.c.b16 %v917, %v916
    %v928 = vpack.c.b16 %v919, %v918
    %v929 = vpack.c.b16 %v921, %v920
    %938 = vmatprep.subr.bf16.mxu0 0
    %939 = vmatpush1.bf16.msra.mxu0 %v929
    %940 = vmatprep.subr.bf16.mxu0 0
    %941 = vmatpush1.bf16.msra.mxu0 %v928
    %942 = vmatprep.subr.bf16.mxu0 0
    %943 = vmatpush1.bf16.msra.mxu0 %v927
    %944 = vmatprep.subr.bf16.mxu0 0
    %945 = vmatpush1.bf16.msra.mxu0 %v926
    %946 = vmatprep.subr.bf16.mxu0 0
    %947 = vmatpush1.bf16.msra.mxu0 %v925
    %948 = vmatprep.subr.bf16.mxu0 0
    %949 = vmatpush1.bf16.msra.mxu0 %v924
    %950 = vmatprep.subr.bf16.mxu0 0
    %951 = vmatpush1.bf16.msra.mxu0 %v923
    %952 = vmatprep.subr.bf16.mxu0 0
    %953 = vmatpush1.bf16.msra.mxu0 %v922
    %954 = vmatprep.subr.bf16.mxu0 0
    %955 = vmatpush2.bf16.msra.mxu0 0
    %956 = vmatprep.subr.bf16.mxu0 0
    %957 = vmatpush2.bf16.msra.mxu0 0
    %958 = vmatprep.subr.bf16.mxu0 0
    %959 = vmatpush2.bf16.msra.mxu0 0
    %960 = vmatprep.subr.bf16.mxu0 0
    %961 = vmatpush2.bf16.msra.mxu0 0
    %962 = vmatprep.subr.bf16.mxu0 0
    %963 = vmatpush2.bf16.msra.mxu0 0
    %964 = vmatprep.subr.bf16.mxu0 0
    %965 = vmatpush2.bf16.msra.mxu0 0
    %966 = vmatprep.subr.bf16.mxu0 0
    %967 = vmatpush2.bf16.msra.mxu0 0
    %968 = vmatprep.subr.bf16.mxu0 0
    %969 = vmatpush2.bf16.msra.mxu0 0
    %970 = vmatprep.mubr.bf16.mxu0 0
    %971 = vmatmul.mubr.bf16.gmra.mxu0 %v872
    %v972 = vpop.f32.mrf.mxu0
    %v973 = vadd.f32 %v889, %v972
    %v974 = vpop.f32.mrf.mxu0
    %v975 = vpop.f32.mrf.mxu0
    %v976 = vadd.f32 %v889, %v975
    %v977 = vpop.f32.mrf.mxu0
    %978 = vdwg.mxu0
    %v979 = vmax.f32 %v973, 0.0
    %v980 = vmax.f32 %v976, 0.0
    %v981 = vpack.c.bf16 %v980, %v979
    %v982 = vld [vmem:[#allocation2 + $0x300] sm:$0xf]
    %v983 = vld [vmem:[#allocation2 + $0x30c] sm:$0xf]
    %v984 = vld [vmem:[#allocation2 + $0x318] sm:$0xf]
    %v985 = vld [vmem:[#allocation2 + $0x324] sm:$0xf]
    %v986 = vld [vmem:[#allocation2 + $0x330] sm:$0xf]
    %v987 = vld [vmem:[#allocation2 + $0x33c] sm:$0xf]
    %v988 = vld [vmem:[#allocation2 + $0x348] sm:$0xf]
    %v989 = vld [vmem:[#allocation2 + $0x354] sm:$0xf]
    %v990 = vld [vmem:[#allocation2 + $0x360] sm:$0xf]
    %v991 = vld [vmem:[#allocation2 + $0x36c] sm:$0xf]
    %v992 = vld [vmem:[#allocation2 + $0x378] sm:$0xf]
    %v993 = vld [vmem:[#allocation2 + $0x384] sm:$0xf]
    %v994 = vld [vmem:[#allocation2 + $0x390] sm:$0xf]
    %v995 = vld [vmem:[#allocation2 + $0x39c] sm:$0xf]
    %v996 = vld [vmem:[#allocation2 + $0x3a8] sm:$0xf]
    %v997 = vld [vmem:[#allocation2 + $0x3b4] sm:$0xf]
    %v998 = vld [vmem:[%s2 + $0x4] ss:$0 sm:$0xff]
    %v1015 = vunpack.c.l.b16 %v982
    %v1016 = vunpack.c.l.b16 %v983
    %v1017 = vunpack.c.l.b16 %v984
    %v1018 = vunpack.c.l.b16 %v985
    %v1019 = vunpack.c.l.b16 %v986
    %v1020 = vunpack.c.l.b16 %v987
    %v1021 = vunpack.c.l.b16 %v988
    %v1022 = vunpack.c.l.b16 %v989
    %v1023 = vunpack.c.l.b16 %v990
    %v1024 = vunpack.c.l.b16 %v991
    %v1025 = vunpack.c.l.b16 %v992
    %v1026 = vunpack.c.l.b16 %v993
    %v1027 = vunpack.c.l.b16 %v994
    %v1028 = vunpack.c.l.b16 %v995
    %v1029 = vunpack.c.l.b16 %v996
    %v1030 = vunpack.c.l.b16 %v997
    %v1031 = vpack.c.b16 %v1016, %v1015
    %v1032 = vpack.c.b16 %v1018, %v1017
    %v1033 = vpack.c.b16 %v1020, %v1019
    %v1034 = vpack.c.b16 %v1022, %v1021
    %v1035 = vpack.c.b16 %v1024, %v1023
    %v1036 = vpack.c.b16 %v1026, %v1025
    %v1037 = vpack.c.b16 %v1028, %v1027
    %v1038 = vpack.c.b16 %v1030, %v1029
    %1047 = vmatprep.subr.bf16.mxu0 0
    %1048 = vmatpush1.bf16.msra.mxu0 %v1038
    %1049 = vmatprep.subr.bf16.mxu0 0
    %1050 = vmatpush1.bf16.msra.mxu0 %v1037
    %1051 = vmatprep.subr.bf16.mxu0 0
    %1052 = vmatpush1.bf16.msra.mxu0 %v1036
    %1053 = vmatprep.subr.bf16.mxu0 0
    %1054 = vmatpush1.bf16.msra.mxu0 %v1035
    %1055 = vmatprep.subr.bf16.mxu0 0
    %1056 = vmatpush1.bf16.msra.mxu0 %v1034
    %1057 = vmatprep.subr.bf16.mxu0 0
    %1058 = vmatpush1.bf16.msra.mxu0 %v1033
    %1059 = vmatprep.subr.bf16.mxu0 0
    %1060 = vmatpush1.bf16.msra.mxu0 %v1032
    %1061 = vmatprep.subr.bf16.mxu0 0
    %1062 = vmatpush1.bf16.msra.mxu0 %v1031
    %1063 = vmatprep.subr.bf16.mxu0 0
    %1064 = vmatpush2.bf16.msra.mxu0 0
    %1065 = vmatprep.subr.bf16.mxu0 0
    %1066 = vmatpush2.bf16.msra.mxu0 0
    %1067 = vmatprep.subr.bf16.mxu0 0
    %1068 = vmatpush2.bf16.msra.mxu0 0
    %1069 = vmatprep.subr.bf16.mxu0 0
    %1070 = vmatpush2.bf16.msra.mxu0 0
    %1071 = vmatprep.subr.bf16.mxu0 0
    %1072 = vmatpush2.bf16.msra.mxu0 0
    %1073 = vmatprep.subr.bf16.mxu0 0
    %1074 = vmatpush2.bf16.msra.mxu0 0
    %1075 = vmatprep.subr.bf16.mxu0 0
    %1076 = vmatpush2.bf16.msra.mxu0 0
    %1077 = vmatprep.subr.bf16.mxu0 0
    %1078 = vmatpush2.bf16.msra.mxu0 0
    %1079 = vmatprep.mubr.bf16.mxu0 0
    %1080 = vmatmul.mubr.bf16.gmra.mxu0 %v981
    %v1081 = vpop.f32.mrf.mxu0
    %v1082 = vadd.f32 %v998, %v1081
    %v1083 = vpop.f32.mrf.mxu0
    %v1084 = vpop.f32.mrf.mxu0
    %v1085 = vadd.f32 %v998, %v1084
    %v1086 = vpop.f32.mrf.mxu0
    %1087 = vdwg.mxu0
    %v1088 = vmax.f32 %v1082, 0.0
    %v1089 = vmax.f32 %v1085, 0.0
    %v1090 = vpack.c.bf16 %v1089, %v1088
    %v1091 = vld [vmem:[#allocation2 + $0x304] sm:$0xf]
    %v1092 = vld [vmem:[#allocation2 + $0x310] sm:$0xf]
    %v1093 = vld [vmem:[#allocation2 + $0x31c] sm:$0xf]
    %v1094 = vld [vmem:[#allocation2 + $0x328] sm:$0xf]
    %v1095 = vld [vmem:[#allocation2 + $0x334] sm:$0xf]
    %v1096 = vld [vmem:[#allocation2 + $0x340] sm:$0xf]
    %v1097 = vld [vmem:[#allocation2 + $0x34c] sm:$0xf]
    %v1098 = vld [vmem:[#allocation2 + $0x358] sm:$0xf]
    %v1099 = vld [vmem:[#allocation2 + $0x364] sm:$0xf]
    %v1100 = vld [vmem:[#allocation2 + $0x370] sm:$0xf]
    %v1101 = vld [vmem:[#allocation2 + $0x37c] sm:$0xf]
    %v1102 = vld [vmem:[#allocation2 + $0x388] sm:$0xf]
    %v1103 = vld [vmem:[#allocation2 + $0x394] sm:$0xf]
    %v1104 = vld [vmem:[#allocation2 + $0x3a0] sm:$0xf]
    %v1105 = vld [vmem:[#allocation2 + $0x3ac] sm:$0xf]
    %v1106 = vld [vmem:[#allocation2 + $0x3b8] sm:$0xf]
    %v1107 = vld [vmem:[%s2 + $0x5] ss:$0 sm:$0xff]
    %v1124 = vunpack.c.l.b16 %v1091
    %v1125 = vunpack.c.l.b16 %v1092
    %v1126 = vunpack.c.l.b16 %v1093
    %v1127 = vunpack.c.l.b16 %v1094
    %v1128 = vunpack.c.l.b16 %v1095
    %v1129 = vunpack.c.l.b16 %v1096
    %v1130 = vunpack.c.l.b16 %v1097
    %v1131 = vunpack.c.l.b16 %v1098
    %v1132 = vunpack.c.l.b16 %v1099
    %v1133 = vunpack.c.l.b16 %v1100
    %v1134 = vunpack.c.l.b16 %v1101
    %v1135 = vunpack.c.l.b16 %v1102
    %v1136 = vunpack.c.l.b16 %v1103
    %v1137 = vunpack.c.l.b16 %v1104
    %v1138 = vunpack.c.l.b16 %v1105
    %v1139 = vunpack.c.l.b16 %v1106
    %v1140 = vpack.c.b16 %v1125, %v1124
    %v1141 = vpack.c.b16 %v1127, %v1126
    %v1142 = vpack.c.b16 %v1129, %v1128
    %v1143 = vpack.c.b16 %v1131, %v1130
    %v1144 = vpack.c.b16 %v1133, %v1132
    %v1145 = vpack.c.b16 %v1135, %v1134
    %v1146 = vpack.c.b16 %v1137, %v1136
    %v1147 = vpack.c.b16 %v1139, %v1138
    %1156 = vmatprep.subr.bf16.mxu0 0
    %1157 = vmatpush1.bf16.msra.mxu0 %v1147
    %1158 = vmatprep.subr.bf16.mxu0 0
    %1159 = vmatpush1.bf16.msra.mxu0 %v1146
    %1160 = vmatprep.subr.bf16.mxu0 0
    %1161 = vmatpush1.bf16.msra.mxu0 %v1145
    %1162 = vmatprep.subr.bf16.mxu0 0
    %1163 = vmatpush1.bf16.msra.mxu0 %v1144
    %1164 = vmatprep.subr.bf16.mxu0 0
    %1165 = vmatpush1.bf16.msra.mxu0 %v1143
    %1166 = vmatprep.subr.bf16.mxu0 0
    %1167 = vmatpush1.bf16.msra.mxu0 %v1142
    %1168 = vmatprep.subr.bf16.mxu0 0
    %1169 = vmatpush1.bf16.msra.mxu0 %v1141
    %1170 = vmatprep.subr.bf16.mxu0 0
    %1171 = vmatpush1.bf16.msra.mxu0 %v1140
    %1172 = vmatprep.subr.bf16.mxu0 0
    %1173 = vmatpush2.bf16.msra.mxu0 0
    %1174 = vmatprep.subr.bf16.mxu0 0
    %1175 = vmatpush2.bf16.msra.mxu0 0
    %1176 = vmatprep.subr.bf16.mxu0 0
    %1177 = vmatpush2.bf16.msra.mxu0 0
    %1178 = vmatprep.subr.bf16.mxu0 0
    %1179 = vmatpush2.bf16.msra.mxu0 0
    %1180 = vmatprep.subr.bf16.mxu0 0
    %1181 = vmatpush2.bf16.msra.mxu0 0
    %1182 = vmatprep.subr.bf16.mxu0 0
    %1183 = vmatpush2.bf16.msra.mxu0 0
    %1184 = vmatprep.subr.bf16.mxu0 0
    %1185 = vmatpush2.bf16.msra.mxu0 0
    %1186 = vmatprep.subr.bf16.mxu0 0
    %1187 = vmatpush2.bf16.msra.mxu0 0
    %1188 = vmatprep.mubr.bf16.mxu0 0
    %1189 = vmatmul.mubr.bf16.gmra.mxu0 %v1090
    %v1190 = vpop.f32.mrf.mxu0
    %v1191 = vadd.f32 %v1107, %v1190
    %v1192 = vpop.f32.mrf.mxu0
    %v1193 = vpop.f32.mrf.mxu0
    %v1194 = vadd.f32 %v1107, %v1193
    %v1195 = vpop.f32.mrf.mxu0
    %1196 = vdwg.mxu0
    %v1197 = vmax.f32 %v1191, 0.0
    %v1198 = vmax.f32 %v1194, 0.0
    %v1199 = vpack.c.bf16 %v1198, %v1197
    %v1200 = vld [vmem:[#allocation2 + $0x3c0] sm:$0xff]
    %v1201 = vld [vmem:[#allocation2 + $0x3cc] sm:$0xff]
    %v1202 = vld [vmem:[#allocation2 + $0x3d8] sm:$0xff]
    %v1203 = vld [vmem:[#allocation2 + $0x3e4] sm:$0xff]
    %v1204 = vld [vmem:[#allocation2 + $0x3f0] sm:$0xff]
    %v1205 = vld [vmem:[#allocation2 + $0x3fc] sm:$0xff]
    %v1206 = vld [vmem:[#allocation2 + $0x408] sm:$0xff]
    %v1207 = vld [vmem:[#allocation2 + $0x414] sm:$0xff]
    %v1208 = vld [vmem:[#allocation2 + $0x420] sm:$0xff]
    %v1209 = vld [vmem:[#allocation2 + $0x42c] sm:$0xff]
    %v1210 = vld [vmem:[#allocation2 + $0x438] sm:$0xff]
    %v1211 = vld [vmem:[#allocation2 + $0x444] sm:$0xff]
    %v1212 = vld [vmem:[#allocation2 + $0x450] sm:$0xff]
    %v1213 = vld [vmem:[#allocation2 + $0x45c] sm:$0xff]
    %v1214 = vld [vmem:[#allocation2 + $0x468] sm:$0xff]
    %v1215 = vld [vmem:[#allocation2 + $0x474] sm:$0xff]
    %s1216 = scalar_lea.vmem %s2, 6
    %v1217 = vld [vmem:[%s1216] ss:$8 sm:$0x3]
    %v1219 = vlaneseq
    %v1220 = vshrl.u32 %v1219, 7
    %v1221 = vsub.s32 0, %v1220
    %v1222 = vrot.slane %v1217, %v1221
    %v1223 = vlaneseq
    %v1224 = vshrl.u32 %v1223, 7
    %v1225 = vsub.s32 1, %v1224
    %v1226 = vrot.slane %v1217, %v1225
    %v1245 = vunpack.c.l.b16 %v1200
    %v1246 = vunpack.c.h.b16 %v1200
    %v1247 = vunpack.c.l.b16 %v1201
    %v1248 = vunpack.c.h.b16 %v1201
    %v1249 = vunpack.c.l.b16 %v1202
    %v1250 = vunpack.c.h.b16 %v1202
    %v1251 = vunpack.c.l.b16 %v1203
    %v1252 = vunpack.c.h.b16 %v1203
    %v1253 = vunpack.c.l.b16 %v1204
    %v1254 = vunpack.c.h.b16 %v1204
    %v1255 = vunpack.c.l.b16 %v1205
    %v1256 = vunpack.c.h.b16 %v1205
    %v1257 = vunpack.c.l.b16 %v1206
    %v1258 = vunpack.c.h.b16 %v1206
    %v1259 = vunpack.c.l.b16 %v1207
    %v1260 = vunpack.c.h.b16 %v1207
    %v1261 = vunpack.c.l.b16 %v1208
    %v1262 = vunpack.c.h.b16 %v1208
    %v1263 = vunpack.c.l.b16 %v1209
    %v1264 = vunpack.c.h.b16 %v1209
    %v1265 = vunpack.c.l.b16 %v1210
    %v1266 = vunpack.c.h.b16 %v1210
    %v1267 = vunpack.c.l.b16 %v1211
    %v1268 = vunpack.c.h.b16 %v1211
    %v1269 = vunpack.c.l.b16 %v1212
    %v1270 = vunpack.c.h.b16 %v1212
    %v1271 = vunpack.c.l.b16 %v1213
    %v1272 = vunpack.c.h.b16 %v1213
    %v1273 = vunpack.c.l.b16 %v1214
    %v1274 = vunpack.c.h.b16 %v1214
    %v1275 = vunpack.c.l.b16 %v1215
    %v1276 = vunpack.c.h.b16 %v1215
    %v1277 = vpack.c.b16 %v1247, %v1245
    %v1278 = vpack.c.b16 %v1248, %v1246
    %v1279 = vpack.c.b16 %v1251, %v1249
    %v1280 = vpack.c.b16 %v1252, %v1250
    %v1281 = vpack.c.b16 %v1255, %v1253
    %v1282 = vpack.c.b16 %v1256, %v1254
    %v1283 = vpack.c.b16 %v1259, %v1257
    %v1284 = vpack.c.b16 %v1260, %v1258
    %v1285 = vpack.c.b16 %v1263, %v1261
    %v1286 = vpack.c.b16 %v1264, %v1262
    %v1287 = vpack.c.b16 %v1267, %v1265
    %v1288 = vpack.c.b16 %v1268, %v1266
    %v1289 = vpack.c.b16 %v1271, %v1269
    %v1290 = vpack.c.b16 %v1272, %v1270
    %v1291 = vpack.c.b16 %v1275, %v1273
    %v1292 = vpack.c.b16 %v1276, %v1274
    %1309 = vmatprep.subr.bf16.mxu0 %v1292
    %1310 = vmatpush1.bf16.msra.mxu0 %v1291
    %1311 = vmatprep.subr.bf16.mxu0 %v1290
    %1312 = vmatpush1.bf16.msra.mxu0 %v1289
    %1313 = vmatprep.subr.bf16.mxu0 %v1288
    %1314 = vmatpush1.bf16.msra.mxu0 %v1287
    %1315 = vmatprep.subr.bf16.mxu0 %v1286
    %1316 = vmatpush1.bf16.msra.mxu0 %v1285
    %1317 = vmatprep.subr.bf16.mxu0 %v1284
    %1318 = vmatpush1.bf16.msra.mxu0 %v1283
    %1319 = vmatprep.subr.bf16.mxu0 %v1282
    %1320 = vmatpush1.bf16.msra.mxu0 %v1281
    %1321 = vmatprep.subr.bf16.mxu0 %v1280
    %1322 = vmatpush1.bf16.msra.mxu0 %v1279
    %1323 = vmatprep.subr.bf16.mxu0 %v1278
    %1324 = vmatpush1.bf16.msra.mxu0 %v1277
    %1325 = vmatprep.subr.bf16.mxu0 0
    %1326 = vmatpush2.bf16.msra.mxu0 0
    %1327 = vmatprep.subr.bf16.mxu0 0
    %1328 = vmatpush2.bf16.msra.mxu0 0
    %1329 = vmatprep.subr.bf16.mxu0 0
    %1330 = vmatpush2.bf16.msra.mxu0 0
    %1331 = vmatprep.subr.bf16.mxu0 0
    %1332 = vmatpush2.bf16.msra.mxu0 0
    %1333 = vmatprep.subr.bf16.mxu0 0
    %1334 = vmatpush2.bf16.msra.mxu0 0
    %1335 = vmatprep.subr.bf16.mxu0 0
    %1336 = vmatpush2.bf16.msra.mxu0 0
    %1337 = vmatprep.subr.bf16.mxu0 0
    %1338 = vmatpush2.bf16.msra.mxu0 0
    %1339 = vmatprep.subr.bf16.mxu0 0
    %1340 = vmatpush2.bf16.msra.mxu0 0
    %1341 = vmatprep.mubr.bf16.mxu0 0
    %1342 = vmatmul.mubr.bf16.gmra.mxu0 %v1199
    %v1343 = vpop.f32.mrf.mxu0
    %v1344 = vadd.f32 %v1222, %v1343
    %v1345 = vpop.f32.mrf.mxu0
    %v1346 = vadd.f32 %v1226, %v1345
    %v1347 = vpop.f32.mrf.mxu0
    %v1348 = vadd.f32 %v1222, %v1347
    %v1349 = vpop.f32.mrf.mxu0
    %v1350 = vadd.f32 %v1226, %v1349
    %1351 = vdwg.mxu0
    %v1352 = vmax.f32 %v1344, 0.0
    %v1353 = vmax.f32 %v1346, 0.0
    %v1354 = vmax.f32 %v1348, 0.0
    %v1355 = vmax.f32 %v1350, 0.0
    %v1356 = vpack.c.bf16 %v1354, %v1352
    %v1357 = vpack.c.bf16 %v1355, %v1353
    %v1358 = vld [vmem:[#allocation2 + $0x480] sm:$0xff]
    %v1359 = vld [vmem:[#allocation2 + $0x48c] sm:$0xff]
    %v1360 = vld [vmem:[#allocation2 + $0x498] sm:$0xff]
    %v1361 = vld [vmem:[#allocation2 + $0x4a4] sm:$0xff]
    %v1362 = vld [vmem:[#allocation2 + $0x4b0] sm:$0xff]
    %v1363 = vld [vmem:[#allocation2 + $0x4bc] sm:$0xff]
    %v1364 = vld [vmem:[#allocation2 + $0x4c8] sm:$0xff]
    %v1365 = vld [vmem:[#allocation2 + $0x4d4] sm:$0xff]
    %v1366 = vld [vmem:[#allocation2 + $0x4e0] sm:$0xff]
    %v1367 = vld [vmem:[#allocation2 + $0x4ec] sm:$0xff]
    %v1368 = vld [vmem:[#allocation2 + $0x4f8] sm:$0xff]
    %v1369 = vld [vmem:[#allocation2 + $0x504] sm:$0xff]
    %v1370 = vld [vmem:[#allocation2 + $0x510] sm:$0xff]
    %v1371 = vld [vmem:[#allocation2 + $0x51c] sm:$0xff]
    %v1372 = vld [vmem:[#allocation2 + $0x528] sm:$0xff]
    %v1373 = vld [vmem:[#allocation2 + $0x534] sm:$0xff]
    %v1374 = vld [vmem:[#allocation2 + $0x540] sm:$0xff]
    %v1375 = vld [vmem:[#allocation2 + $0x54c] sm:$0xff]
    %v1376 = vld [vmem:[#allocation2 + $0x558] sm:$0xff]
    %v1377 = vld [vmem:[#allocation2 + $0x564] sm:$0xff]
    %v1378 = vld [vmem:[#allocation2 + $0x570] sm:$0xff]
    %v1379 = vld [vmem:[#allocation2 + $0x57c] sm:$0xff]
    %v1380 = vld [vmem:[#allocation2 + $0x588] sm:$0xff]
    %v1381 = vld [vmem:[#allocation2 + $0x594] sm:$0xff]
    %v1382 = vld [vmem:[#allocation2 + $0x5a0] sm:$0xff]
    %v1383 = vld [vmem:[#allocation2 + $0x5ac] sm:$0xff]
    %v1384 = vld [vmem:[#allocation2 + $0x5b8] sm:$0xff]
    %v1385 = vld [vmem:[#allocation2 + $0x5c4] sm:$0xff]
    %v1386 = vld [vmem:[#allocation2 + $0x5d0] sm:$0xff]
    %v1387 = vld [vmem:[#allocation2 + $0x5dc] sm:$0xff]
    %v1388 = vld [vmem:[#allocation2 + $0x5e8] sm:$0xff]
    %v1389 = vld [vmem:[#allocation2 + $0x5f4] sm:$0xff]
    %s1390 = scalar_lea.vmem %s2, 7
    %v1391 = vld [vmem:[%s1390] ss:$8 sm:$0x3]
    %v1393 = vlaneseq
    %v1394 = vshrl.u32 %v1393, 7
    %v1395 = vsub.s32 0, %v1394
    %v1396 = vrot.slane %v1391, %v1395
    %v1397 = vlaneseq
    %v1398 = vshrl.u32 %v1397, 7
    %v1399 = vsub.s32 1, %v1398
    %v1400 = vrot.slane %v1391, %v1399
    %v1435 = vunpack.c.l.b16 %v1358
    %v1436 = vunpack.c.h.b16 %v1358
    %v1437 = vunpack.c.l.b16 %v1359
    %v1438 = vunpack.c.h.b16 %v1359
    %v1439 = vunpack.c.l.b16 %v1360
    %v1440 = vunpack.c.h.b16 %v1360
    %v1441 = vunpack.c.l.b16 %v1361
    %v1442 = vunpack.c.h.b16 %v1361
    %v1443 = vunpack.c.l.b16 %v1362
    %v1444 = vunpack.c.h.b16 %v1362
    %v1445 = vunpack.c.l.b16 %v1363
    %v1446 = vunpack.c.h.b16 %v1363
    %v1447 = vunpack.c.l.b16 %v1364
    %v1448 = vunpack.c.h.b16 %v1364
    %v1449 = vunpack.c.l.b16 %v1365
    %v1450 = vunpack.c.h.b16 %v1365
    %v1451 = vunpack.c.l.b16 %v1366
    %v1452 = vunpack.c.h.b16 %v1366
    %v1453 = vunpack.c.l.b16 %v1367
    %v1454 = vunpack.c.h.b16 %v1367
    %v1455 = vunpack.c.l.b16 %v1368
    %v1456 = vunpack.c.h.b16 %v1368
    %v1457 = vunpack.c.l.b16 %v1369
    %v1458 = vunpack.c.h.b16 %v1369
    %v1459 = vunpack.c.l.b16 %v1370
    %v1460 = vunpack.c.h.b16 %v1370
    %v1461 = vunpack.c.l.b16 %v1371
    %v1462 = vunpack.c.h.b16 %v1371
    %v1463 = vunpack.c.l.b16 %v1372
    %v1464 = vunpack.c.h.b16 %v1372
    %v1465 = vunpack.c.l.b16 %v1373
    %v1466 = vunpack.c.h.b16 %v1373
    %v1467 = vunpack.c.l.b16 %v1374
    %v1468 = vunpack.c.h.b16 %v1374
    %v1469 = vunpack.c.l.b16 %v1375
    %v1470 = vunpack.c.h.b16 %v1375
    %v1471 = vunpack.c.l.b16 %v1376
    %v1472 = vunpack.c.h.b16 %v1376
    %v1473 = vunpack.c.l.b16 %v1377
    %v1474 = vunpack.c.h.b16 %v1377
    %v1475 = vunpack.c.l.b16 %v1378
    %v1476 = vunpack.c.h.b16 %v1378
    %v1477 = vunpack.c.l.b16 %v1379
    %v1478 = vunpack.c.h.b16 %v1379
    %v1479 = vunpack.c.l.b16 %v1380
    %v1480 = vunpack.c.h.b16 %v1380
    %v1481 = vunpack.c.l.b16 %v1381
    %v1482 = vunpack.c.h.b16 %v1381
    %v1483 = vunpack.c.l.b16 %v1382
    %v1484 = vunpack.c.h.b16 %v1382
    %v1485 = vunpack.c.l.b16 %v1383
    %v1486 = vunpack.c.h.b16 %v1383
    %v1487 = vunpack.c.l.b16 %v1384
    %v1488 = vunpack.c.h.b16 %v1384
    %v1489 = vunpack.c.l.b16 %v1385
    %v1490 = vunpack.c.h.b16 %v1385
    %v1491 = vunpack.c.l.b16 %v1386
    %v1492 = vunpack.c.h.b16 %v1386
    %v1493 = vunpack.c.l.b16 %v1387
    %v1494 = vunpack.c.h.b16 %v1387
    %v1495 = vunpack.c.l.b16 %v1388
    %v1496 = vunpack.c.h.b16 %v1388
    %v1497 = vunpack.c.l.b16 %v1389
    %v1498 = vunpack.c.h.b16 %v1389
    %v1499 = vpack.c.b16 %v1437, %v1435
    %v1500 = vpack.c.b16 %v1438, %v1436
    %v1501 = vpack.c.b16 %v1441, %v1439
    %v1502 = vpack.c.b16 %v1442, %v1440
    %v1503 = vpack.c.b16 %v1445, %v1443
    %v1504 = vpack.c.b16 %v1446, %v1444
    %v1505 = vpack.c.b16 %v1449, %v1447
    %v1506 = vpack.c.b16 %v1450, %v1448
    %v1507 = vpack.c.b16 %v1453, %v1451
    %v1508 = vpack.c.b16 %v1454, %v1452
    %v1509 = vpack.c.b16 %v1457, %v1455
    %v1510 = vpack.c.b16 %v1458, %v1456
    %v1511 = vpack.c.b16 %v1461, %v1459
    %v1512 = vpack.c.b16 %v1462, %v1460
    %v1513 = vpack.c.b16 %v1465, %v1463
    %v1514 = vpack.c.b16 %v1466, %v1464
    %v1515 = vpack.c.b16 %v1469, %v1467
    %v1516 = vpack.c.b16 %v1470, %v1468
    %v1517 = vpack.c.b16 %v1473, %v1471
    %v1518 = vpack.c.b16 %v1474, %v1472
    %v1519 = vpack.c.b16 %v1477, %v1475
    %v1520 = vpack.c.b16 %v1478, %v1476
    %v1521 = vpack.c.b16 %v1481, %v1479
    %v1522 = vpack.c.b16 %v1482, %v1480
    %v1523 = vpack.c.b16 %v1485, %v1483
    %v1524 = vpack.c.b16 %v1486, %v1484
    %v1525 = vpack.c.b16 %v1489, %v1487
    %v1526 = vpack.c.b16 %v1490, %v1488
    %v1527 = vpack.c.b16 %v1493, %v1491
    %v1528 = vpack.c.b16 %v1494, %v1492
    %v1529 = vpack.c.b16 %v1497, %v1495
    %v1530 = vpack.c.b16 %v1498, %v1496
    %1563 = vmatprep.subr.bf16.mxu0 %v1514
    %1564 = vmatpush1.bf16.msra.mxu0 %v1513
    %1565 = vmatprep.subr.bf16.mxu0 %v1512
    %1566 = vmatpush1.bf16.msra.mxu0 %v1511
    %1567 = vmatprep.subr.bf16.mxu0 %v1510
    %1568 = vmatpush1.bf16.msra.mxu0 %v1509
    %1569 = vmatprep.subr.bf16.mxu0 %v1508
    %1570 = vmatpush1.bf16.msra.mxu0 %v1507
    %1571 = vmatprep.subr.bf16.mxu0 %v1506
    %1572 = vmatpush1.bf16.msra.mxu0 %v1505
    %1573 = vmatprep.subr.bf16.mxu0 %v1504
    %1574 = vmatpush1.bf16.msra.mxu0 %v1503
    %1575 = vmatprep.subr.bf16.mxu0 %v1502
    %1576 = vmatpush1.bf16.msra.mxu0 %v1501
    %1577 = vmatprep.subr.bf16.mxu0 %v1500
    %1578 = vmatpush1.bf16.msra.mxu0 %v1499
    %1579 = vmatprep.subr.bf16.mxu0 %v1530
    %1580 = vmatpush2.bf16.msra.mxu0 %v1529
    %1581 = vmatprep.subr.bf16.mxu0 %v1528
    %1582 = vmatpush2.bf16.msra.mxu0 %v1527
    %1583 = vmatprep.subr.bf16.mxu0 %v1526
    %1584 = vmatpush2.bf16.msra.mxu0 %v1525
    %1585 = vmatprep.subr.bf16.mxu0 %v1524
    %1586 = vmatpush2.bf16.msra.mxu0 %v1523
    %1587 = vmatprep.subr.bf16.mxu0 %v1522
    %1588 = vmatpush2.bf16.msra.mxu0 %v1521
    %1589 = vmatprep.subr.bf16.mxu0 %v1520
    %1590 = vmatpush2.bf16.msra.mxu0 %v1519
    %1591 = vmatprep.subr.bf16.mxu0 %v1518
    %1592 = vmatpush2.bf16.msra.mxu0 %v1517
    %1593 = vmatprep.subr.bf16.mxu0 %v1516
    %1594 = vmatpush2.bf16.msra.mxu0 %v1515
    %1595 = vmatprep.mubr.bf16.mxu0 %v1357
    %1596 = vmatmul.mubr.bf16.gmra.mxu0 %v1356
    %v1597 = vpop.f32.mrf.mxu0
    %v1598 = vadd.f32 %v1396, %v1597
    %v1599 = vpop.f32.mrf.mxu0
    %v1600 = vadd.f32 %v1400, %v1599
    %v1601 = vpop.f32.mrf.mxu0
    %v1602 = vadd.f32 %v1396, %v1601
    %v1603 = vpop.f32.mrf.mxu0
    %v1604 = vadd.f32 %v1400, %v1603
    %1605 = vdwg.mxu0
    %v1606 = vmax.f32 %v1598, 0.0
    %v1607 = vmax.f32 %v1600, 0.0
    %v1608 = vmax.f32 %v1602, 0.0
    %v1609 = vmax.f32 %v1604, 0.0
    %v1610 = vpack.c.bf16 %v1608, %v1606
    %v1611 = vpack.c.bf16 %v1609, %v1607
    %v1612 = vld [vmem:[#allocation2 + $0x308] sm:$0xf]
    %v1613 = vld [vmem:[#allocation2 + $0x314] sm:$0xf]
    %v1614 = vld [vmem:[#allocation2 + $0x320] sm:$0xf]
    %v1615 = vld [vmem:[#allocation2 + $0x32c] sm:$0xf]
    %v1616 = vld [vmem:[#allocation2 + $0x338] sm:$0xf]
    %v1617 = vld [vmem:[#allocation2 + $0x344] sm:$0xf]
    %v1618 = vld [vmem:[#allocation2 + $0x350] sm:$0xf]
    %v1619 = vld [vmem:[#allocation2 + $0x35c] sm:$0xf]
    %v1620 = vld [vmem:[#allocation2 + $0x368] sm:$0xf]
    %v1621 = vld [vmem:[#allocation2 + $0x374] sm:$0xf]
    %v1622 = vld [vmem:[#allocation2 + $0x380] sm:$0xf]
    %v1623 = vld [vmem:[#allocation2 + $0x38c] sm:$0xf]
    %v1624 = vld [vmem:[#allocation2 + $0x398] sm:$0xf]
    %v1625 = vld [vmem:[#allocation2 + $0x3a4] sm:$0xf]
    %v1626 = vld [vmem:[#allocation2 + $0x3b0] sm:$0xf]
    %v1627 = vld [vmem:[#allocation2 + $0x3bc] sm:$0xf]
    %v1628 = vld [vmem:[#allocation2 + $0x3c8] sm:$0xf]
    %v1629 = vld [vmem:[#allocation2 + $0x3d4] sm:$0xf]
    %v1630 = vld [vmem:[#allocation2 + $0x3e0] sm:$0xf]
    %v1631 = vld [vmem:[#allocation2 + $0x3ec] sm:$0xf]
    %v1632 = vld [vmem:[#allocation2 + $0x3f8] sm:$0xf]
    %v1633 = vld [vmem:[#allocation2 + $0x404] sm:$0xf]
    %v1634 = vld [vmem:[#allocation2 + $0x410] sm:$0xf]
    %v1635 = vld [vmem:[#allocation2 + $0x41c] sm:$0xf]
    %v1636 = vld [vmem:[#allocation2 + $0x428] sm:$0xf]
    %v1637 = vld [vmem:[#allocation2 + $0x434] sm:$0xf]
    %v1638 = vld [vmem:[#allocation2 + $0x440] sm:$0xf]
    %v1639 = vld [vmem:[#allocation2 + $0x44c] sm:$0xf]
    %v1640 = vld [vmem:[#allocation2 + $0x458] sm:$0xf]
    %v1641 = vld [vmem:[#allocation2 + $0x464] sm:$0xf]
    %v1642 = vld [vmem:[#allocation2 + $0x470] sm:$0xf]
    %v1643 = vld [vmem:[#allocation2 + $0x47c] sm:$0xf]
    %v1644 = vld [vmem:[%s2 + $0x18] ss:$0 sm:$0xff]
    %v1677 = vunpack.c.l.b16 %v1612
    %v1678 = vunpack.c.l.b16 %v1613
    %v1679 = vunpack.c.l.b16 %v1614
    %v1680 = vunpack.c.l.b16 %v1615
    %v1681 = vunpack.c.l.b16 %v1616
    %v1682 = vunpack.c.l.b16 %v1617
    %v1683 = vunpack.c.l.b16 %v1618
    %v1684 = vunpack.c.l.b16 %v1619
    %v1685 = vunpack.c.l.b16 %v1620
    %v1686 = vunpack.c.l.b16 %v1621
    %v1687 = vunpack.c.l.b16 %v1622
    %v1688 = vunpack.c.l.b16 %v1623
    %v1689 = vunpack.c.l.b16 %v1624
    %v1690 = vunpack.c.l.b16 %v1625
    %v1691 = vunpack.c.l.b16 %v1626
    %v1692 = vunpack.c.l.b16 %v1627
    %v1693 = vunpack.c.l.b16 %v1628
    %v1694 = vunpack.c.l.b16 %v1629
    %v1695 = vunpack.c.l.b16 %v1630
    %v1696 = vunpack.c.l.b16 %v1631
    %v1697 = vunpack.c.l.b16 %v1632
    %v1698 = vunpack.c.l.b16 %v1633
    %v1699 = vunpack.c.l.b16 %v1634
    %v1700 = vunpack.c.l.b16 %v1635
    %v1701 = vunpack.c.l.b16 %v1636
    %v1702 = vunpack.c.l.b16 %v1637
    %v1703 = vunpack.c.l.b16 %v1638
    %v1704 = vunpack.c.l.b16 %v1639
    %v1705 = vunpack.c.l.b16 %v1640
    %v1706 = vunpack.c.l.b16 %v1641
    %v1707 = vunpack.c.l.b16 %v1642
    %v1708 = vunpack.c.l.b16 %v1643
    %v1709 = vpack.c.b16 %v1678, %v1677
    %v1710 = vpack.c.b16 %v1680, %v1679
    %v1711 = vpack.c.b16 %v1682, %v1681
    %v1712 = vpack.c.b16 %v1684, %v1683
    %v1713 = vpack.c.b16 %v1686, %v1685
    %v1714 = vpack.c.b16 %v1688, %v1687
    %v1715 = vpack.c.b16 %v1690, %v1689
    %v1716 = vpack.c.b16 %v1692, %v1691
    %v1717 = vpack.c.b16 %v1694, %v1693
    %v1718 = vpack.c.b16 %v1696, %v1695
    %v1719 = vpack.c.b16 %v1698, %v1697
    %v1720 = vpack.c.b16 %v1700, %v1699
    %v1721 = vpack.c.b16 %v1702, %v1701
    %v1722 = vpack.c.b16 %v1704, %v1703
    %v1723 = vpack.c.b16 %v1706, %v1705
    %v1724 = vpack.c.b16 %v1708, %v1707
    %1741 = vmatprep.subr.bf16.mxu0 0
    %1742 = vmatpush1.bf16.msra.mxu0 %v1716
    %1743 = vmatprep.subr.bf16.mxu0 0
    %1744 = vmatpush1.bf16.msra.mxu0 %v1715
    %1745 = vmatprep.subr.bf16.mxu0 0
    %1746 = vmatpush1.bf16.msra.mxu0 %v1714
    %1747 = vmatprep.subr.bf16.mxu0 0
    %1748 = vmatpush1.bf16.msra.mxu0 %v1713
    %1749 = vmatprep.subr.bf16.mxu0 0
    %1750 = vmatpush1.bf16.msra.mxu0 %v1712
    %1751 = vmatprep.subr.bf16.mxu0 0
    %1752 = vmatpush1.bf16.msra.mxu0 %v1711
    %1753 = vmatprep.subr.bf16.mxu0 0
    %1754 = vmatpush1.bf16.msra.mxu0 %v1710
    %1755 = vmatprep.subr.bf16.mxu0 0
    %1756 = vmatpush1.bf16.msra.mxu0 %v1709
    %1757 = vmatprep.subr.bf16.mxu0 0
    %1758 = vmatpush2.bf16.msra.mxu0 %v1724
    %1759 = vmatprep.subr.bf16.mxu0 0
    %1760 = vmatpush2.bf16.msra.mxu0 %v1723
    %1761 = vmatprep.subr.bf16.mxu0 0
    %1762 = vmatpush2.bf16.msra.mxu0 %v1722
    %1763 = vmatprep.subr.bf16.mxu0 0
    %1764 = vmatpush2.bf16.msra.mxu0 %v1721
    %1765 = vmatprep.subr.bf16.mxu0 0
    %1766 = vmatpush2.bf16.msra.mxu0 %v1720
    %1767 = vmatprep.subr.bf16.mxu0 0
    %1768 = vmatpush2.bf16.msra.mxu0 %v1719
    %1769 = vmatprep.subr.bf16.mxu0 0
    %1770 = vmatpush2.bf16.msra.mxu0 %v1718
    %1771 = vmatprep.subr.bf16.mxu0 0
    %1772 = vmatpush2.bf16.msra.mxu0 %v1717
    %1773 = vmatprep.mubr.bf16.mxu0 %v1611
    %1774 = vmatmul.mubr.bf16.gmra.mxu0 %v1610
    %v1775 = vpop.f32.mrf.mxu0
    %v1776 = vadd.f32 %v1644, %v1775
    %v1777 = vpop.f32.mrf.mxu0
    %v1778 = vpop.f32.mrf.mxu0
    %v1779 = vadd.f32 %v1644, %v1778
    %v1780 = vpop.f32.mrf.mxu0
    %1781 = vdwg.mxu0
    %1782 = vst [vmem:[%s3] sm:$0xff] %v1776
    %1783 = vst [vmem:[%s3 + $0x8] sm:$0xff] %v1779
    // Predicated region
    $region18: #{forward.1} parent=1 // pred_check
      _
    $region19: #{forward.1} parent=1 // pred_check_branch
      %1785 = sbr.rel (0) target = $region21
    $region20: #{forward.1} parent=1 // pred_region
      _
    $region21: #{forward.1} parent=1 // pred_fallthru
      _
    // Predicated region
    $region22: #{forward.1} parent=1 // pred_check
      _
    $region23: #{forward.1} parent=1 // pred_check_branch
      %1787 = sbr.rel (0) target = $region25
    $region24: #{forward.1} parent=1 // pred_region
      _
    $region25: #{forward.1} parent=1 // pred_fallthru
      _
    %1788 = vsyncpa [#allocation3], 1

</llo_original>
